<compile_context>
chip_gen: v5e
topology: v5e:2x2
jax: 0.10.0
libtpu: 0.0.40
codegen_flags: <defaults>
</compile_context>

<pallas_src>
import functools

import jax
import jax.numpy as jnp
from jax.experimental import pallas as pl
from jax.experimental.pallas import tpu as pltpu


N_HEADS = 8
# Which of (real=0, imag=1) feeds each head's Q / K / V, in T_att1..T_att8 order.
Q_SRC = (0, 0, 1, 1, 0, 0, 1, 1)
K_SRC = (0, 1, 0, 1, 0, 1, 0, 1)
V_SRC = (0, 1, 1, 0, 1, 0, 0, 1)
# MXU operand dtype (accumulation stays f32). Set to jnp.float32 for exact matmuls.
MATMUL_DTYPE = jnp.bfloat16


# ----------------------------- Pallas kernel --------------------------------


def _layer_norm(x, gamma, beta, eps=1e-5):
    mu = jnp.mean(x, axis=-1, keepdims=True)
    var = jnp.mean(jnp.square(x - mu), axis=-1, keepdims=True)
    return (x - mu) * jax.lax.rsqrt(var + eps) * gamma + beta


def _self_attention_t_kernel(real_ref, imag_ref,
                             ln1g_ref, ln1b_ref,
                             wq_ref, bq_ref, wk_ref, bk_ref, wv_ref, bv_ref,
                             ln2g_ref, ln2b_ref,
                             out_ref, *, hidden_channel, n_heads, mm_dtype):
    """Per-batch-block kernel.

    real_ref / imag_ref : (Bb, T, C)      f32
    w*_ref              : (2C, 8H)        packed block-sparse weights (mm_dtype)
    b*_ref              : (1, 8H)         f32 (Q bias already scaled by 1/sqrt(H))
    ln*_ref             : (1, C) / (1, H) f32
    out_ref             : (Bb, T, 2H)     f32  == [real_att || imag_att]
    """
    Bb, T, C = real_ref.shape
    H = hidden_channel
    NH = n_heads * H

    # ---- LayerNorm1 over the channel dim, real and imag independently -------
    g1 = ln1g_ref[...]
    b1 = ln1b_ref[...]
    r = _layer_norm(real_ref[...], g1, b1)            # (Bb, T, C) f32
    i = _layer_norm(imag_ref[...], g1, b1)

    # ---- Fused projections: one lane-dense matmul each for Q / K / V --------
    x_cat = jnp.concatenate([r, i], axis=-1)          # (Bb, T, 2C)
    xf = x_cat.reshape(Bb * T, 2 * C).astype(mm_dtype)

    q_all = (jnp.dot(xf, wq_ref[...], preferred_element_type=jnp.float32)
             + bq_ref[...]).reshape(Bb, T, NH).astype(mm_dtype)
    k_all = (jnp.dot(xf, wk_ref[...], preferred_element_type=jnp.float32)
             + bk_ref[...]).reshape(Bb, T, NH).astype(mm_dtype)
    v_all = (jnp.dot(xf, wv_ref[...], preferred_element_type=jnp.float32)
             + bv_ref[...]).reshape(Bb, T, NH).astype(mm_dtype)

    # ---- 8 attention heads, accumulated into real / imag with +/- signs -----
    # TODO(synk): for large T, tile the query dim with an online-softmax
    # (flash-style) loop instead of materializing the full (T, T) energy.
    real_acc = jnp.zeros((Bb, T, H), jnp.float32)
    imag_acc = jnp.zeros((Bb, T, H), jnp.float32)

    for h in range(n_heads):
        lo, hi = h * H, (h + 1) * H
        qh = q_all[:, :, lo:hi]                       # (Bb, T, H)
        kh = k_all[:, :, lo:hi]                       # (Bb, T, H)
        vh = v_all[:, :, lo:hi]                       # (Bb, T, H)

        # energy = (Q / sqrt(H)) @ K^T   (scale folded into Wq/bq)
        energy = jnp.einsum('bqh,bkh->bqk', qh, kh,
                            preferred_element_type=jnp.float32)   # (Bb, T, T)
        energy = energy - jnp.max(energy, axis=-1, keepdims=True)
        p = jnp.exp(energy)
        p = p * pl.reciprocal(jnp.sum(p, axis=-1, keepdims=True), approx=True)

        wv = jnp.einsum('bqk,bkh->bqh', p.astype(mm_dtype), vh,
                        preferred_element_type=jnp.float32)       # (Bb, T, H)

        # real_att = A - B - C - D ; imag_att = E + F + G - H
        if h == 0:
            real_acc = real_acc + wv
        elif h < 4:
            real_acc = real_acc - wv
        elif h < 7:
            imag_acc = imag_acc + wv
        else:
            imag_acc = imag_acc - wv

    # ---- LayerNorm2 over the hidden dim, real and imag independently --------
    g2 = ln2g_ref[...]
    b2 = ln2b_ref[...]
    real_o = _layer_norm(real_acc, g2, b2)
    imag_o = _layer_norm(imag_acc, g2, b2)

    out_ref[...] = jnp.concatenate([real_o, imag_o], axis=-1).astype(out_ref.dtype)


# ------------------------------ call wrapper ---------------------------------


def _pick_block_b(batch):
    """Largest evenly-dividing batch block that keeps >= 2 grid steps (v7x megacore)."""
    for bb in (8, 4, 2, 1):
        if batch % bb == 0 and batch // bb >= 2:
            return bb
    return batch


def _vmem_limit_bytes(bb, t, c, h, n_heads):
    f32, mm = 4, jnp.dtype(MATMUL_DTYPE).itemsize
    nh = n_heads * h
    io = 2 * (2 * bb * t * c * f32) + 2 * (bb * t * 2 * h * f32)       # dbl-buffered I/O
    params = 2 * (3 * (2 * c * nh * mm + nh * f32) + 2 * (c + h) * f32)
    inter = (3 * bb * t * nh * (f32 + mm)                              # q/k/v slabs
             + 3 * bb * t * t * f32                                    # energy / softmax
             + 4 * bb * t * h * f32)                                   # accumulators, LN
    est = io + params + inter
    return int(min(max(3 * est, 32 * 1024 * 1024), 48 * 1024 * 1024))


def self_attention_t_pallas(real, imag, packed, *, block_b=None):
    """real, imag: (B, T, C) f32.  Returns (B, T, 2H) f32 = [real_att || imag_att]."""
    B, T, C = real.shape
    NH = packed["wq"].shape[1]
    H = packed["ln2_g"].shape[-1]
    n_heads = NH // H
    assert packed["wq"].shape[0] == 2 * C

    Bb = block_b if block_b is not None else _pick_block_b(B)
    assert B % Bb == 0
    grid = (B // Bb,)

    kernel = functools.partial(
        _self_attention_t_kernel,
        hidden_channel=H, n_heads=n_heads, mm_dtype=packed["wq"].dtype)

    x_spec = pl.BlockSpec((Bb, T, C), lambda b: (b, 0, 0))
    w_spec = pl.BlockSpec((2 * C, NH), lambda b: (0, 0))
    bias_spec = pl.BlockSpec((1, NH), lambda b: (0, 0))
    ln_c_spec = pl.BlockSpec((1, C), lambda b: (0, 0))
    ln_h_spec = pl.BlockSpec((1, H), lambda b: (0, 0))
    o_spec = pl.BlockSpec((Bb, T, 2 * H), lambda b: (b, 0, 0))

    return pl.pallas_call(
        kernel,
        grid=grid,
        in_specs=[x_spec, x_spec,
                  ln_c_spec, ln_c_spec,
                  w_spec, bias_spec, w_spec, bias_spec, w_spec, bias_spec,
                  ln_h_spec, ln_h_spec],
        out_specs=o_spec,
        out_shape=jax.ShapeDtypeStruct((B, T, 2 * H), jnp.float32),
        compiler_params=pltpu.CompilerParams(
            dimension_semantics=("parallel",),
            vmem_limit_bytes=_vmem_limit_bytes(Bb, T, C, H, n_heads)),
    )(real, imag,
      packed["ln1_g"], packed["ln1_b"],
      packed["wq"], packed["bq"], packed["wk"], packed["bk"],
      packed["wv"], packed["bv"],
      packed["ln2_g"], packed["ln2_b"])


def self_attention_t_forward(x, packed):
    """x: (B, T, C_in, 2) -> (B, T, H, 2), matching the PyTorch forward."""
    real = x[..., 0]                                   # (B, T, C)
    imag = x[..., 1]
    out = self_attention_t_pallas(real, imag, packed)  # (B, T, 2H), LNs fused in-kernel
    H = packed["ln2_g"].shape[-1]
    return jnp.stack([out[..., :H], out[..., H:]], axis=-1)   # (B, T, H, 2)


# ------------------------------ parameters -----------------------------------


def make_params(key, in_channel, hidden_channel):
    """Deterministic synthetic parameters (shapes match the PyTorch module)."""
    keys = jax.random.split(key, 6)
    bound = 1.0 / (in_channel ** 0.5)
    shape_w = (N_HEADS, in_channel, hidden_channel)
    shape_b = (N_HEADS, hidden_channel)
    return {
        "wq": jax.random.uniform(keys[0], shape_w, jnp.float32, -bound, bound),
        "wk": jax.random.uniform(keys[1], shape_w, jnp.float32, -bound, bound),
        "wv": jax.random.uniform(keys[2], shape_w, jnp.float32, -bound, bound),
        "bq": jax.random.uniform(keys[3], shape_b, jnp.float32, -bound, bound),
        "bk": jax.random.uniform(keys[4], shape_b, jnp.float32, -bound, bound),
        "bv": jax.random.uniform(keys[5], shape_b, jnp.float32, -bound, bound),
        # PyTorch LayerNorm default init: weight=1, bias=0
        "ln1_g": jnp.ones((in_channel,), jnp.float32),
        "ln1_b": jnp.zeros((in_channel,), jnp.float32),
        "ln2_g": jnp.ones((hidden_channel,), jnp.float32),
        "ln2_b": jnp.zeros((hidden_channel,), jnp.float32),
    }


def _pack_qkv(w, b, src, scale=1.0):
    """w: (8, C, H), b: (8, H) -> block-sparse (2C, 8H) weight over [real||imag], (1, 8H) bias."""
    n_heads, C, H = w.shape
    wp = jnp.zeros((2 * C, n_heads * H), jnp.float32)
    for h in range(n_heads):
        r0 = src[h] * C
        wp = wp.at[r0:r0 + C, h * H:(h + 1) * H].set(w[h] * scale)
    bp = (b * scale).reshape(1, n_heads * H)
    return wp.astype(MATMUL_DTYPE), bp.astype(jnp.float32)


def pack_params(params):
    """Pack per-head weights into lane-dense kernel parameters (scale folded into Q)."""
    H = params["wq"].shape[-1]
    scale = 1.0 / (H ** 0.5)
    wq, bq = _pack_qkv(params["wq"], params["bq"], Q_SRC, scale)
    wk, bk = _pack_qkv(params["wk"], params["bk"], K_SRC)
    wv, bv = _pack_qkv(params["wv"], params["bv"], V_SRC)
    return {
        "wq": wq, "bq": bq, "wk": wk, "bk": bk, "wv": wv, "bv": bv,
        "ln1_g": params["ln1_g"].reshape(1, -1).astype(jnp.float32),
        "ln1_b": params["ln1_b"].reshape(1, -1).astype(jnp.float32),
        "ln2_g": params["ln2_g"].reshape(1, -1).astype(jnp.float32),
        "ln2_b": params["ln2_b"].reshape(1, -1).astype(jnp.float32),
    }


if __name__ == "__main__":
    B, T, C_in, H = 2, 8, 4, 32   # batch, time, in_channel, hidden_channel

    key = jax.random.PRNGKey(0)
    k_x, k_p = jax.random.split(key)
    x = jax.random.normal(k_x, (B, T, C_in, 2), dtype=jnp.float32)
    params = make_params(k_p, C_in, H)
    packed = pack_params(params)

    out = jax.jit(self_attention_t_forward)(x, packed)
    out = jax.block_until_ready(out)

    assert out.shape == (B, T, H, 2), out.shape
    assert bool(jnp.all(jnp.isfinite(out)))
    print("KERNEL_OK")
</pallas_src>

<mosaic_0001>
module attributes {stable_mosaic.version = 11 : i64} {
  func.func @_self_attention_t_kernel(%arg0: i32, %arg1: memref<1x8x4xf32, #tpu.memory_space<vmem>>, %arg2: memref<1x8x4xf32, #tpu.memory_space<vmem>>, %arg3: memref<1x4xf32, #tpu.memory_space<vmem>>, %arg4: memref<1x4xf32, #tpu.memory_space<vmem>>, %arg5: memref<8x256xbf16, #tpu.memory_space<vmem>>, %arg6: memref<1x256xf32, #tpu.memory_space<vmem>>, %arg7: memref<8x256xbf16, #tpu.memory_space<vmem>>, %arg8: memref<1x256xf32, #tpu.memory_space<vmem>>, %arg9: memref<8x256xbf16, #tpu.memory_space<vmem>>, %arg10: memref<1x256xf32, #tpu.memory_space<vmem>>, %arg11: memref<1x32xf32, #tpu.memory_space<vmem>>, %arg12: memref<1x32xf32, #tpu.memory_space<vmem>>, %arg13: memref<1x8x64xf32, #tpu.memory_space<vmem>>) attributes {dimension_semantics = [#tpu.dimension_semantics<parallel>], iteration_bounds = array<i64: 2>, scalar_prefetch = 0 : i64, scratch_operands = 0 : i64, tpu.core_type = #tpu.core_type<tc>, window_params = [{transform_indices = @transform_0, window_bounds = array<i64: 1, 8, 4>}, {transform_indices = @transform_1, window_bounds = array<i64: 1, 8, 4>}, {pipeline_mode = #tpu.pipeline_mode<synchronous>, transform_indices = @transform_2, window_bounds = array<i64: 1, 4>}, {pipeline_mode = #tpu.pipeline_mode<synchronous>, transform_indices = @transform_3, window_bounds = array<i64: 1, 4>}, {pipeline_mode = #tpu.pipeline_mode<synchronous>, transform_indices = @transform_4, window_bounds = array<i64: 8, 256>}, {pipeline_mode = #tpu.pipeline_mode<synchronous>, transform_indices = @transform_5, window_bounds = array<i64: 1, 256>}, {pipeline_mode = #tpu.pipeline_mode<synchronous>, transform_indices = @transform_6, window_bounds = array<i64: 8, 256>}, {pipeline_mode = #tpu.pipeline_mode<synchronous>, transform_indices = @transform_7, window_bounds = array<i64: 1, 256>}, {pipeline_mode = #tpu.pipeline_mode<synchronous>, transform_indices = @transform_8, window_bounds = array<i64: 8, 256>}, {pipeline_mode = #tpu.pipeline_mode<synchronous>, transform_indices = @transform_9, window_bounds = array<i64: 1, 256>}, {pipeline_mode = #tpu.pipeline_mode<synchronous>, transform_indices = @transform_10, window_bounds = array<i64: 1, 32>}, {pipeline_mode = #tpu.pipeline_mode<synchronous>, transform_indices = @transform_11, window_bounds = array<i64: 1, 32>}, {transform_indices = @transform_12, window_bounds = array<i64: 1, 8, 64>}]} {
    %c0 = arith.constant 0 : index
    %c0_0 = arith.constant 0 : index
    %0 = vector.load %arg3[%c0, %c0_0] : memref<1x4xf32, #tpu.memory_space<vmem>>, vector<1x4xf32>
    %c0_1 = arith.constant 0 : index
    %c0_2 = arith.constant 0 : index
    %1 = vector.load %arg4[%c0_1, %c0_2] : memref<1x4xf32, #tpu.memory_space<vmem>>, vector<1x4xf32>
    %c0_3 = arith.constant 0 : index
    %c0_4 = arith.constant 0 : index
    %c0_5 = arith.constant 0 : index
    %2 = vector.load %arg1[%c0_3, %c0_4, %c0_5] : memref<1x8x4xf32, #tpu.memory_space<vmem>>, vector<1x8x4xf32>
    %cst = arith.constant dense<0.000000e+00> : vector<1x8xf32>
    %3 = vector.multi_reduction <add>, %2, %cst [2] : vector<1x8x4xf32> to vector<1x8xf32>
    %4 = vector.shape_cast %3 : vector<1x8xf32> to vector<1x8x1xf32>
    %cst_6 = arith.constant 4.000000e+00 : f32
    %5 = vector.broadcast %cst_6 : f32 to vector<1x8x1xf32>
    %6 = arith.divf %4, %5 : vector<1x8x1xf32>
    %7 = vector.broadcast %6 : vector<1x8x1xf32> to vector<1x8x4xf32>
    %8 = arith.subf %2, %7 : vector<1x8x4xf32>
    %9 = arith.mulf %8, %8 : vector<1x8x4xf32>
    %cst_7 = arith.constant dense<0.000000e+00> : vector<1x8xf32>
    %10 = vector.multi_reduction <add>, %9, %cst_7 [2] : vector<1x8x4xf32> to vector<1x8xf32>
    %11 = vector.shape_cast %10 : vector<1x8xf32> to vector<1x8x1xf32>
    %cst_8 = arith.constant 4.000000e+00 : f32
    %12 = vector.broadcast %cst_8 : f32 to vector<1x8x1xf32>
    %13 = arith.divf %11, %12 : vector<1x8x1xf32>
    %14 = vector.broadcast %6 : vector<1x8x1xf32> to vector<1x8x4xf32>
    %15 = arith.subf %2, %14 : vector<1x8x4xf32>
    %cst_9 = arith.constant 9.99999974E-6 : f32
    %16 = vector.broadcast %cst_9 : f32 to vector<1x8x1xf32>
    %17 = arith.addf %13, %16 : vector<1x8x1xf32>
    %18 = math.rsqrt %17 : vector<1x8x1xf32>
    %19 = vector.broadcast %18 : vector<1x8x1xf32> to vector<1x8x4xf32>
    %20 = arith.mulf %15, %19 : vector<1x8x4xf32>
    %21 = vector.shape_cast %0 : vector<1x4xf32> to vector<1x1x4xf32>
    %22 = vector.broadcast %21 : vector<1x1x4xf32> to vector<1x8x4xf32>
    %23 = arith.mulf %20, %22 : vector<1x8x4xf32>
    %24 = vector.shape_cast %1 : vector<1x4xf32> to vector<1x1x4xf32>
    %25 = vector.broadcast %24 : vector<1x1x4xf32> to vector<1x8x4xf32>
    %26 = arith.addf %23, %25 : vector<1x8x4xf32>
    %c0_10 = arith.constant 0 : index
    %c0_11 = arith.constant 0 : index
    %c0_12 = arith.constant 0 : index
    %27 = vector.load %arg2[%c0_10, %c0_11, %c0_12] : memref<1x8x4xf32, #tpu.memory_space<vmem>>, vector<1x8x4xf32>
    %cst_13 = arith.constant dense<0.000000e+00> : vector<1x8xf32>
    %28 = vector.multi_reduction <add>, %27, %cst_13 [2] : vector<1x8x4xf32> to vector<1x8xf32>
    %29 = vector.shape_cast %28 : vector<1x8xf32> to vector<1x8x1xf32>
    %cst_14 = arith.constant 4.000000e+00 : f32
    %30 = vector.broadcast %cst_14 : f32 to vector<1x8x1xf32>
    %31 = arith.divf %29, %30 : vector<1x8x1xf32>
    %32 = vector.broadcast %31 : vector<1x8x1xf32> to vector<1x8x4xf32>
    %33 = arith.subf %27, %32 : vector<1x8x4xf32>
    %34 = arith.mulf %33, %33 : vector<1x8x4xf32>
    %cst_15 = arith.constant dense<0.000000e+00> : vector<1x8xf32>
    %35 = vector.multi_reduction <add>, %34, %cst_15 [2] : vector<1x8x4xf32> to vector<1x8xf32>
    %36 = vector.shape_cast %35 : vector<1x8xf32> to vector<1x8x1xf32>
    %cst_16 = arith.constant 4.000000e+00 : f32
    %37 = vector.broadcast %cst_16 : f32 to vector<1x8x1xf32>
    %38 = arith.divf %36, %37 : vector<1x8x1xf32>
    %39 = vector.broadcast %31 : vector<1x8x1xf32> to vector<1x8x4xf32>
    %40 = arith.subf %27, %39 : vector<1x8x4xf32>
    %cst_17 = arith.constant 9.99999974E-6 : f32
    %41 = vector.broadcast %cst_17 : f32 to vector<1x8x1xf32>
    %42 = arith.addf %38, %41 : vector<1x8x1xf32>
    %43 = math.rsqrt %42 : vector<1x8x1xf32>
    %44 = vector.broadcast %43 : vector<1x8x1xf32> to vector<1x8x4xf32>
    %45 = arith.mulf %40, %44 : vector<1x8x4xf32>
    %46 = vector.shape_cast %0 : vector<1x4xf32> to vector<1x1x4xf32>
    %47 = vector.broadcast %46 : vector<1x1x4xf32> to vector<1x8x4xf32>
    %48 = arith.mulf %45, %47 : vector<1x8x4xf32>
    %49 = vector.shape_cast %1 : vector<1x4xf32> to vector<1x1x4xf32>
    %50 = vector.broadcast %49 : vector<1x1x4xf32> to vector<1x8x4xf32>
    %51 = arith.addf %48, %50 : vector<1x8x4xf32>
    %52 = tpu.concatenate %26, %51 in 2 : vector<1x8x4xf32>, vector<1x8x4xf32> -> vector<1x8x8xf32>
    %53 = vector.shape_cast %52 : vector<1x8x8xf32> to vector<8x8xf32>
    %54 = arith.truncf %53 : vector<8x8xf32> to vector<8x8xbf16>
    %c0_18 = arith.constant 0 : index
    %c0_19 = arith.constant 0 : index
    %55 = vector.load %arg5[%c0_18, %c0_19] : memref<8x256xbf16, #tpu.memory_space<vmem>>, vector<8x256xbf16>
    %cst_20 = arith.constant dense<0.000000e+00> : vector<8x256xf32>
    %56 = tpu.matmul %54, %55, %cst_20 {dimension_numbers = #tpu.dot_dimension_numbers<[1], [0], [0], [1], [0, 0, 1, 1], [], []>} : vector<8x8xbf16>, vector<8x256xbf16>, vector<8x256xf32> -> vector<8x256xf32>
    %c0_21 = arith.constant 0 : index
    %c0_22 = arith.constant 0 : index
    %57 = vector.load %arg6[%c0_21, %c0_22] : memref<1x256xf32, #tpu.memory_space<vmem>>, vector<1x256xf32>
    %58 = vector.broadcast %57 : vector<1x256xf32> to vector<8x256xf32>
    %59 = arith.addf %56, %58 : vector<8x256xf32>
    %60 = vector.shape_cast %59 : vector<8x256xf32> to vector<1x8x256xf32>
    %61 = arith.truncf %60 : vector<1x8x256xf32> to vector<1x8x256xbf16>
    %c0_23 = arith.constant 0 : index
    %c0_24 = arith.constant 0 : index
    %62 = vector.load %arg7[%c0_23, %c0_24] : memref<8x256xbf16, #tpu.memory_space<vmem>>, vector<8x256xbf16>
    %cst_25 = arith.constant dense<0.000000e+00> : vector<8x256xf32>
    %63 = tpu.matmul %54, %62, %cst_25 {dimension_numbers = #tpu.dot_dimension_numbers<[1], [0], [0], [1], [0, 0, 1, 1], [], []>} : vector<8x8xbf16>, vector<8x256xbf16>, vector<8x256xf32> -> vector<8x256xf32>
    %c0_26 = arith.constant 0 : index
    %c0_27 = arith.constant 0 : index
    %64 = vector.load %arg8[%c0_26, %c0_27] : memref<1x256xf32, #tpu.memory_space<vmem>>, vector<1x256xf32>
    %65 = vector.broadcast %64 : vector<1x256xf32> to vector<8x256xf32>
    %66 = arith.addf %63, %65 : vector<8x256xf32>
    %67 = vector.shape_cast %66 : vector<8x256xf32> to vector<1x8x256xf32>
    %68 = arith.truncf %67 : vector<1x8x256xf32> to vector<1x8x256xbf16>
    %c0_28 = arith.constant 0 : index
    %c0_29 = arith.constant 0 : index
    %69 = vector.load %arg9[%c0_28, %c0_29] : memref<8x256xbf16, #tpu.memory_space<vmem>>, vector<8x256xbf16>
    %cst_30 = arith.constant dense<0.000000e+00> : vector<8x256xf32>
    %70 = tpu.matmul %54, %69, %cst_30 {dimension_numbers = #tpu.dot_dimension_numbers<[1], [0], [0], [1], [0, 0, 1, 1], [], []>} : vector<8x8xbf16>, vector<8x256xbf16>, vector<8x256xf32> -> vector<8x256xf32>
    %c0_31 = arith.constant 0 : index
    %c0_32 = arith.constant 0 : index
    %71 = vector.load %arg10[%c0_31, %c0_32] : memref<1x256xf32, #tpu.memory_space<vmem>>, vector<1x256xf32>
    %72 = vector.broadcast %71 : vector<1x256xf32> to vector<8x256xf32>
    %73 = arith.addf %70, %72 : vector<8x256xf32>
    %74 = vector.shape_cast %73 : vector<8x256xf32> to vector<1x8x256xf32>
    %75 = arith.truncf %74 : vector<1x8x256xf32> to vector<1x8x256xbf16>
    %cst_33 = arith.constant 0.000000e+00 : f32
    %76 = vector.broadcast %cst_33 : f32 to vector<1x8x32xf32>
    %cst_34 = arith.constant 0.000000e+00 : f32
    %77 = vector.broadcast %cst_34 : f32 to vector<1x8x32xf32>
    %78 = vector.extract_strided_slice %61 {offsets = [0, 0, 0], sizes = [1, 8, 32], strides = [1, 1, 1]} : vector<1x8x256xbf16> to vector<1x8x32xbf16>
    %79 = vector.extract_strided_slice %68 {offsets = [0, 0, 0], sizes = [1, 8, 32], strides = [1, 1, 1]} : vector<1x8x256xbf16> to vector<1x8x32xbf16>
    %80 = vector.extract_strided_slice %75 {offsets = [0, 0, 0], sizes = [1, 8, 32], strides = [1, 1, 1]} : vector<1x8x256xbf16> to vector<1x8x32xbf16>
    "tpu.trace_start"() <{level = 10 : i32, message = "bqh,bkh->bqk"}> : () -> ()
    %cst_35 = arith.constant dense<0.000000e+00> : vector<1x8x8xf32>
    %81 = tpu.matmul %78, %79, %cst_35 {dimension_numbers = #tpu.dot_dimension_numbers<[2], [2], [1], [1], [0, 0, 0, 1, 1, 1], [0], [0]>} : vector<1x8x32xbf16>, vector<1x8x32xbf16>, vector<1x8x8xf32> -> vector<1x8x8xf32>
    "tpu.trace_stop"() : () -> ()
    %cst_36 = arith.constant dense<0xFF800000> : vector<1x8xf32>
    %82 = vector.multi_reduction <maximumf>, %81, %cst_36 [2] : vector<1x8x8xf32> to vector<1x8xf32>
    %83 = vector.shape_cast %82 : vector<1x8xf32> to vector<1x8x1xf32>
    %84 = vector.broadcast %83 : vector<1x8x1xf32> to vector<1x8x8xf32>
    %85 = arith.subf %81, %84 : vector<1x8x8xf32>
    %86 = math.exp %85 : vector<1x8x8xf32>
    %cst_37 = arith.constant dense<0.000000e+00> : vector<1x8xf32>
    %87 = vector.multi_reduction <add>, %86, %cst_37 [2] : vector<1x8x8xf32> to vector<1x8xf32>
    %88 = vector.shape_cast %87 : vector<1x8xf32> to vector<1x8x1xf32>
    %89 = tpu.reciprocal %88 {approx = true} : vector<1x8x1xf32> -> vector<1x8x1xf32>
    %90 = vector.broadcast %89 : vector<1x8x1xf32> to vector<1x8x8xf32>
    %91 = arith.mulf %86, %90 : vector<1x8x8xf32>
    %92 = arith.truncf %91 : vector<1x8x8xf32> to vector<1x8x8xbf16>
    "tpu.trace_start"() <{level = 10 : i32, message = "bqk,bkh->bqh"}> : () -> ()
    %cst_38 = arith.constant dense<0.000000e+00> : vector<1x8x32xf32>
    %93 = tpu.matmul %92, %80, %cst_38 {dimension_numbers = #tpu.dot_dimension_numbers<[2], [1], [1], [2], [0, 0, 0, 1, 1, 2], [0], [0]>} : vector<1x8x8xbf16>, vector<1x8x32xbf16>, vector<1x8x32xf32> -> vector<1x8x32xf32>
    "tpu.trace_stop"() : () -> ()
    %94 = arith.addf %76, %93 : vector<1x8x32xf32>
    %95 = vector.extract_strided_slice %61 {offsets = [0, 0, 32], sizes = [1, 8, 32], strides = [1, 1, 1]} : vector<1x8x256xbf16> to vector<1x8x32xbf16>
    %96 = vector.extract_strided_slice %68 {offsets = [0, 0, 32], sizes = [1, 8, 32], strides = [1, 1, 1]} : vector<1x8x256xbf16> to vector<1x8x32xbf16>
    %97 = vector.extract_strided_slice %75 {offsets = [0, 0, 32], sizes = [1, 8, 32], strides = [1, 1, 1]} : vector<1x8x256xbf16> to vector<1x8x32xbf16>
    "tpu.trace_start"() <{level = 10 : i32, message = "bqh,bkh->bqk"}> : () -> ()
    %cst_39 = arith.constant dense<0.000000e+00> : vector<1x8x8xf32>
    %98 = tpu.matmul %95, %96, %cst_39 {dimension_numbers = #tpu.dot_dimension_numbers<[2], [2], [1], [1], [0, 0, 0, 1, 1, 1], [0], [0]>} : vector<1x8x32xbf16>, vector<1x8x32xbf16>, vector<1x8x8xf32> -> vector<1x8x8xf32>
    "tpu.trace_stop"() : () -> ()
    %cst_40 = arith.constant dense<0xFF800000> : vector<1x8xf32>
    %99 = vector.multi_reduction <maximumf>, %98, %cst_40 [2] : vector<1x8x8xf32> to vector<1x8xf32>
    %100 = vector.shape_cast %99 : vector<1x8xf32> to vector<1x8x1xf32>
    %101 = vector.broadcast %100 : vector<1x8x1xf32> to vector<1x8x8xf32>
    %102 = arith.subf %98, %101 : vector<1x8x8xf32>
    %103 = math.exp %102 : vector<1x8x8xf32>
    %cst_41 = arith.constant dense<0.000000e+00> : vector<1x8xf32>
    %104 = vector.multi_reduction <add>, %103, %cst_41 [2] : vector<1x8x8xf32> to vector<1x8xf32>
    %105 = vector.shape_cast %104 : vector<1x8xf32> to vector<1x8x1xf32>
    %106 = tpu.reciprocal %105 {approx = true} : vector<1x8x1xf32> -> vector<1x8x1xf32>
    %107 = vector.broadcast %106 : vector<1x8x1xf32> to vector<1x8x8xf32>
    %108 = arith.mulf %103, %107 : vector<1x8x8xf32>
    %109 = arith.truncf %108 : vector<1x8x8xf32> to vector<1x8x8xbf16>
    "tpu.trace_start"() <{level = 10 : i32, message = "bqk,bkh->bqh"}> : () -> ()
    %cst_42 = arith.constant dense<0.000000e+00> : vector<1x8x32xf32>
    %110 = tpu.matmul %109, %97, %cst_42 {dimension_numbers = #tpu.dot_dimension_numbers<[2], [1], [1], [2], [0, 0, 0, 1, 1, 2], [0], [0]>} : vector<1x8x8xbf16>, vector<1x8x32xbf16>, vector<1x8x32xf32> -> vector<1x8x32xf32>
    "tpu.trace_stop"() : () -> ()
    %111 = arith.subf %94, %110 : vector<1x8x32xf32>
    %112 = vector.extract_strided_slice %61 {offsets = [0, 0, 64], sizes = [1, 8, 32], strides = [1, 1, 1]} : vector<1x8x256xbf16> to vector<1x8x32xbf16>
    %113 = vector.extract_strided_slice %68 {offsets = [0, 0, 64], sizes = [1, 8, 32], strides = [1, 1, 1]} : vector<1x8x256xbf16> to vector<1x8x32xbf16>
    %114 = vector.extract_strided_slice %75 {offsets = [0, 0, 64], sizes = [1, 8, 32], strides = [1, 1, 1]} : vector<1x8x256xbf16> to vector<1x8x32xbf16>
    "tpu.trace_start"() <{level = 10 : i32, message = "bqh,bkh->bqk"}> : () -> ()
    %cst_43 = arith.constant dense<0.000000e+00> : vector<1x8x8xf32>
    %115 = tpu.matmul %112, %113, %cst_43 {dimension_numbers = #tpu.dot_dimension_numbers<[2], [2], [1], [1], [0, 0, 0, 1, 1, 1], [0], [0]>} : vector<1x8x32xbf16>, vector<1x8x32xbf16>, vector<1x8x8xf32> -> vector<1x8x8xf32>
    "tpu.trace_stop"() : () -> ()
    %cst_44 = arith.constant dense<0xFF800000> : vector<1x8xf32>
    %116 = vector.multi_reduction <maximumf>, %115, %cst_44 [2] : vector<1x8x8xf32> to vector<1x8xf32>
    %117 = vector.shape_cast %116 : vector<1x8xf32> to vector<1x8x1xf32>
    %118 = vector.broadcast %117 : vector<1x8x1xf32> to vector<1x8x8xf32>
    %119 = arith.subf %115, %118 : vector<1x8x8xf32>
    %120 = math.exp %119 : vector<1x8x8xf32>
    %cst_45 = arith.constant dense<0.000000e+00> : vector<1x8xf32>
    %121 = vector.multi_reduction <add>, %120, %cst_45 [2] : vector<1x8x8xf32> to vector<1x8xf32>
    %122 = vector.shape_cast %121 : vector<1x8xf32> to vector<1x8x1xf32>
    %123 = tpu.reciprocal %122 {approx = true} : vector<1x8x1xf32> -> vector<1x8x1xf32>
    %124 = vector.broadcast %123 : vector<1x8x1xf32> to vector<1x8x8xf32>
    %125 = arith.mulf %120, %124 : vector<1x8x8xf32>
    %126 = arith.truncf %125 : vector<1x8x8xf32> to vector<1x8x8xbf16>
    "tpu.trace_start"() <{level = 10 : i32, message = "bqk,bkh->bqh"}> : () -> ()
    %cst_46 = arith.constant dense<0.000000e+00> : vector<1x8x32xf32>
    %127 = tpu.matmul %126, %114, %cst_46 {dimension_numbers = #tpu.dot_dimension_numbers<[2], [1], [1], [2], [0, 0, 0, 1, 1, 2], [0], [0]>} : vector<1x8x8xbf16>, vector<1x8x32xbf16>, vector<1x8x32xf32> -> vector<1x8x32xf32>
    "tpu.trace_stop"() : () -> ()
    %128 = arith.subf %111, %127 : vector<1x8x32xf32>
    %129 = vector.extract_strided_slice %61 {offsets = [0, 0, 96], sizes = [1, 8, 32], strides = [1, 1, 1]} : vector<1x8x256xbf16> to vector<1x8x32xbf16>
    %130 = vector.extract_strided_slice %68 {offsets = [0, 0, 96], sizes = [1, 8, 32], strides = [1, 1, 1]} : vector<1x8x256xbf16> to vector<1x8x32xbf16>
    %131 = vector.extract_strided_slice %75 {offsets = [0, 0, 96], sizes = [1, 8, 32], strides = [1, 1, 1]} : vector<1x8x256xbf16> to vector<1x8x32xbf16>
    "tpu.trace_start"() <{level = 10 : i32, message = "bqh,bkh->bqk"}> : () -> ()
    %cst_47 = arith.constant dense<0.000000e+00> : vector<1x8x8xf32>
    %132 = tpu.matmul %129, %130, %cst_47 {dimension_numbers = #tpu.dot_dimension_numbers<[2], [2], [1], [1], [0, 0, 0, 1, 1, 1], [0], [0]>} : vector<1x8x32xbf16>, vector<1x8x32xbf16>, vector<1x8x8xf32> -> vector<1x8x8xf32>
    "tpu.trace_stop"() : () -> ()
    %cst_48 = arith.constant dense<0xFF800000> : vector<1x8xf32>
    %133 = vector.multi_reduction <maximumf>, %132, %cst_48 [2] : vector<1x8x8xf32> to vector<1x8xf32>
    %134 = vector.shape_cast %133 : vector<1x8xf32> to vector<1x8x1xf32>
    %135 = vector.broadcast %134 : vector<1x8x1xf32> to vector<1x8x8xf32>
    %136 = arith.subf %132, %135 : vector<1x8x8xf32>
    %137 = math.exp %136 : vector<1x8x8xf32>
    %cst_49 = arith.constant dense<0.000000e+00> : vector<1x8xf32>
    %138 = vector.multi_reduction <add>, %137, %cst_49 [2] : vector<1x8x8xf32> to vector<1x8xf32>
    %139 = vector.shape_cast %138 : vector<1x8xf32> to vector<1x8x1xf32>
    %140 = tpu.reciprocal %139 {approx = true} : vector<1x8x1xf32> -> vector<1x8x1xf32>
    %141 = vector.broadcast %140 : vector<1x8x1xf32> to vector<1x8x8xf32>
    %142 = arith.mulf %137, %141 : vector<1x8x8xf32>
    %143 = arith.truncf %142 : vector<1x8x8xf32> to vector<1x8x8xbf16>
    "tpu.trace_start"() <{level = 10 : i32, message = "bqk,bkh->bqh"}> : () -> ()
    %cst_50 = arith.constant dense<0.000000e+00> : vector<1x8x32xf32>
    %144 = tpu.matmul %143, %131, %cst_50 {dimension_numbers = #tpu.dot_dimension_numbers<[2], [1], [1], [2], [0, 0, 0, 1, 1, 2], [0], [0]>} : vector<1x8x8xbf16>, vector<1x8x32xbf16>, vector<1x8x32xf32> -> vector<1x8x32xf32>
    "tpu.trace_stop"() : () -> ()
    %145 = arith.subf %128, %144 : vector<1x8x32xf32>
    %146 = vector.extract_strided_slice %61 {offsets = [0, 0, 128], sizes = [1, 8, 32], strides = [1, 1, 1]} : vector<1x8x256xbf16> to vector<1x8x32xbf16>
    %147 = vector.extract_strided_slice %68 {offsets = [0, 0, 128], sizes = [1, 8, 32], strides = [1, 1, 1]} : vector<1x8x256xbf16> to vector<1x8x32xbf16>
    %148 = vector.extract_strided_slice %75 {offsets = [0, 0, 128], sizes = [1, 8, 32], strides = [1, 1, 1]} : vector<1x8x256xbf16> to vector<1x8x32xbf16>
    "tpu.trace_start"() <{level = 10 : i32, message = "bqh,bkh->bqk"}> : () -> ()
    %cst_51 = arith.constant dense<0.000000e+00> : vector<1x8x8xf32>
    %149 = tpu.matmul %146, %147, %cst_51 {dimension_numbers = #tpu.dot_dimension_numbers<[2], [2], [1], [1], [0, 0, 0, 1, 1, 1], [0], [0]>} : vector<1x8x32xbf16>, vector<1x8x32xbf16>, vector<1x8x8xf32> -> vector<1x8x8xf32>
    "tpu.trace_stop"() : () -> ()
    %cst_52 = arith.constant dense<0xFF800000> : vector<1x8xf32>
    %150 = vector.multi_reduction <maximumf>, %149, %cst_52 [2] : vector<1x8x8xf32> to vector<1x8xf32>
    %151 = vector.shape_cast %150 : vector<1x8xf32> to vector<1x8x1xf32>
    %152 = vector.broadcast %151 : vector<1x8x1xf32> to vector<1x8x8xf32>
    %153 = arith.subf %149, %152 : vector<1x8x8xf32>
    %154 = math.exp %153 : vector<1x8x8xf32>
    %cst_53 = arith.constant dense<0.000000e+00> : vector<1x8xf32>
    %155 = vector.multi_reduction <add>, %154, %cst_53 [2] : vector<1x8x8xf32> to vector<1x8xf32>
    %156 = vector.shape_cast %155 : vector<1x8xf32> to vector<1x8x1xf32>
    %157 = tpu.reciprocal %156 {approx = true} : vector<1x8x1xf32> -> vector<1x8x1xf32>
    %158 = vector.broadcast %157 : vector<1x8x1xf32> to vector<1x8x8xf32>
    %159 = arith.mulf %154, %158 : vector<1x8x8xf32>
    %160 = arith.truncf %159 : vector<1x8x8xf32> to vector<1x8x8xbf16>
    "tpu.trace_start"() <{level = 10 : i32, message = "bqk,bkh->bqh"}> : () -> ()
    %cst_54 = arith.constant dense<0.000000e+00> : vector<1x8x32xf32>
    %161 = tpu.matmul %160, %148, %cst_54 {dimension_numbers = #tpu.dot_dimension_numbers<[2], [1], [1], [2], [0, 0, 0, 1, 1, 2], [0], [0]>} : vector<1x8x8xbf16>, vector<1x8x32xbf16>, vector<1x8x32xf32> -> vector<1x8x32xf32>
    "tpu.trace_stop"() : () -> ()
    %162 = arith.addf %77, %161 : vector<1x8x32xf32>
    %163 = vector.extract_strided_slice %61 {offsets = [0, 0, 160], sizes = [1, 8, 32], strides = [1, 1, 1]} : vector<1x8x256xbf16> to vector<1x8x32xbf16>
    %164 = vector.extract_strided_slice %68 {offsets = [0, 0, 160], sizes = [1, 8, 32], strides = [1, 1, 1]} : vector<1x8x256xbf16> to vector<1x8x32xbf16>
    %165 = vector.extract_strided_slice %75 {offsets = [0, 0, 160], sizes = [1, 8, 32], strides = [1, 1, 1]} : vector<1x8x256xbf16> to vector<1x8x32xbf16>
    "tpu.trace_start"() <{level = 10 : i32, message = "bqh,bkh->bqk"}> : () -> ()
    %cst_55 = arith.constant dense<0.000000e+00> : vector<1x8x8xf32>
    %166 = tpu.matmul %163, %164, %cst_55 {dimension_numbers = #tpu.dot_dimension_numbers<[2], [2], [1], [1], [0, 0, 0, 1, 1, 1], [0], [0]>} : vector<1x8x32xbf16>, vector<1x8x32xbf16>, vector<1x8x8xf32> -> vector<1x8x8xf32>
    "tpu.trace_stop"() : () -> ()
    %cst_56 = arith.constant dense<0xFF800000> : vector<1x8xf32>
    %167 = vector.multi_reduction <maximumf>, %166, %cst_56 [2] : vector<1x8x8xf32> to vector<1x8xf32>
    %168 = vector.shape_cast %167 : vector<1x8xf32> to vector<1x8x1xf32>
    %169 = vector.broadcast %168 : vector<1x8x1xf32> to vector<1x8x8xf32>
    %170 = arith.subf %166, %169 : vector<1x8x8xf32>
    %171 = math.exp %170 : vector<1x8x8xf32>
    %cst_57 = arith.constant dense<0.000000e+00> : vector<1x8xf32>
    %172 = vector.multi_reduction <add>, %171, %cst_57 [2] : vector<1x8x8xf32> to vector<1x8xf32>
    %173 = vector.shape_cast %172 : vector<1x8xf32> to vector<1x8x1xf32>
    %174 = tpu.reciprocal %173 {approx = true} : vector<1x8x1xf32> -> vector<1x8x1xf32>
    %175 = vector.broadcast %174 : vector<1x8x1xf32> to vector<1x8x8xf32>
    %176 = arith.mulf %171, %175 : vector<1x8x8xf32>
    %177 = arith.truncf %176 : vector<1x8x8xf32> to vector<1x8x8xbf16>
    "tpu.trace_start"() <{level = 10 : i32, message = "bqk,bkh->bqh"}> : () -> ()
    %cst_58 = arith.constant dense<0.000000e+00> : vector<1x8x32xf32>
    %178 = tpu.matmul %177, %165, %cst_58 {dimension_numbers = #tpu.dot_dimension_numbers<[2], [1], [1], [2], [0, 0, 0, 1, 1, 2], [0], [0]>} : vector<1x8x8xbf16>, vector<1x8x32xbf16>, vector<1x8x32xf32> -> vector<1x8x32xf32>
    "tpu.trace_stop"() : () -> ()
    %179 = arith.addf %162, %178 : vector<1x8x32xf32>
    %180 = vector.extract_strided_slice %61 {offsets = [0, 0, 192], sizes = [1, 8, 32], strides = [1, 1, 1]} : vector<1x8x256xbf16> to vector<1x8x32xbf16>
    %181 = vector.extract_strided_slice %68 {offsets = [0, 0, 192], sizes = [1, 8, 32], strides = [1, 1, 1]} : vector<1x8x256xbf16> to vector<1x8x32xbf16>
    %182 = vector.extract_strided_slice %75 {offsets = [0, 0, 192], sizes = [1, 8, 32], strides = [1, 1, 1]} : vector<1x8x256xbf16> to vector<1x8x32xbf16>
    "tpu.trace_start"() <{level = 10 : i32, message = "bqh,bkh->bqk"}> : () -> ()
    %cst_59 = arith.constant dense<0.000000e+00> : vector<1x8x8xf32>
    %183 = tpu.matmul %180, %181, %cst_59 {dimension_numbers = #tpu.dot_dimension_numbers<[2], [2], [1], [1], [0, 0, 0, 1, 1, 1], [0], [0]>} : vector<1x8x32xbf16>, vector<1x8x32xbf16>, vector<1x8x8xf32> -> vector<1x8x8xf32>
    "tpu.trace_stop"() : () -> ()
    %cst_60 = arith.constant dense<0xFF800000> : vector<1x8xf32>
    %184 = vector.multi_reduction <maximumf>, %183, %cst_60 [2] : vector<1x8x8xf32> to vector<1x8xf32>
    %185 = vector.shape_cast %184 : vector<1x8xf32> to vector<1x8x1xf32>
    %186 = vector.broadcast %185 : vector<1x8x1xf32> to vector<1x8x8xf32>
    %187 = arith.subf %183, %186 : vector<1x8x8xf32>
    %188 = math.exp %187 : vector<1x8x8xf32>
    %cst_61 = arith.constant dense<0.000000e+00> : vector<1x8xf32>
    %189 = vector.multi_reduction <add>, %188, %cst_61 [2] : vector<1x8x8xf32> to vector<1x8xf32>
    %190 = vector.shape_cast %189 : vector<1x8xf32> to vector<1x8x1xf32>
    %191 = tpu.reciprocal %190 {approx = true} : vector<1x8x1xf32> -> vector<1x8x1xf32>
    %192 = vector.broadcast %191 : vector<1x8x1xf32> to vector<1x8x8xf32>
    %193 = arith.mulf %188, %192 : vector<1x8x8xf32>
    %194 = arith.truncf %193 : vector<1x8x8xf32> to vector<1x8x8xbf16>
    "tpu.trace_start"() <{level = 10 : i32, message = "bqk,bkh->bqh"}> : () -> ()
    %cst_62 = arith.constant dense<0.000000e+00> : vector<1x8x32xf32>
    %195 = tpu.matmul %194, %182, %cst_62 {dimension_numbers = #tpu.dot_dimension_numbers<[2], [1], [1], [2], [0, 0, 0, 1, 1, 2], [0], [0]>} : vector<1x8x8xbf16>, vector<1x8x32xbf16>, vector<1x8x32xf32> -> vector<1x8x32xf32>
    "tpu.trace_stop"() : () -> ()
    %196 = arith.addf %179, %195 : vector<1x8x32xf32>
    %197 = vector.extract_strided_slice %61 {offsets = [0, 0, 224], sizes = [1, 8, 32], strides = [1, 1, 1]} : vector<1x8x256xbf16> to vector<1x8x32xbf16>
    %198 = vector.extract_strided_slice %68 {offsets = [0, 0, 224], sizes = [1, 8, 32], strides = [1, 1, 1]} : vector<1x8x256xbf16> to vector<1x8x32xbf16>
    %199 = vector.extract_strided_slice %75 {offsets = [0, 0, 224], sizes = [1, 8, 32], strides = [1, 1, 1]} : vector<1x8x256xbf16> to vector<1x8x32xbf16>
    "tpu.trace_start"() <{level = 10 : i32, message = "bqh,bkh->bqk"}> : () -> ()
    %cst_63 = arith.constant dense<0.000000e+00> : vector<1x8x8xf32>
    %200 = tpu.matmul %197, %198, %cst_63 {dimension_numbers = #tpu.dot_dimension_numbers<[2], [2], [1], [1], [0, 0, 0, 1, 1, 1], [0], [0]>} : vector<1x8x32xbf16>, vector<1x8x32xbf16>, vector<1x8x8xf32> -> vector<1x8x8xf32>
    "tpu.trace_stop"() : () -> ()
    %cst_64 = arith.constant dense<0xFF800000> : vector<1x8xf32>
    %201 = vector.multi_reduction <maximumf>, %200, %cst_64 [2] : vector<1x8x8xf32> to vector<1x8xf32>
    %202 = vector.shape_cast %201 : vector<1x8xf32> to vector<1x8x1xf32>
    %203 = vector.broadcast %202 : vector<1x8x1xf32> to vector<1x8x8xf32>
    %204 = arith.subf %200, %203 : vector<1x8x8xf32>
    %205 = math.exp %204 : vector<1x8x8xf32>
    %cst_65 = arith.constant dense<0.000000e+00> : vector<1x8xf32>
    %206 = vector.multi_reduction <add>, %205, %cst_65 [2] : vector<1x8x8xf32> to vector<1x8xf32>
    %207 = vector.shape_cast %206 : vector<1x8xf32> to vector<1x8x1xf32>
    %208 = tpu.reciprocal %207 {approx = true} : vector<1x8x1xf32> -> vector<1x8x1xf32>
    %209 = vector.broadcast %208 : vector<1x8x1xf32> to vector<1x8x8xf32>
    %210 = arith.mulf %205, %209 : vector<1x8x8xf32>
    %211 = arith.truncf %210 : vector<1x8x8xf32> to vector<1x8x8xbf16>
    "tpu.trace_start"() <{level = 10 : i32, message = "bqk,bkh->bqh"}> : () -> ()
    %cst_66 = arith.constant dense<0.000000e+00> : vector<1x8x32xf32>
    %212 = tpu.matmul %211, %199, %cst_66 {dimension_numbers = #tpu.dot_dimension_numbers<[2], [1], [1], [2], [0, 0, 0, 1, 1, 2], [0], [0]>} : vector<1x8x8xbf16>, vector<1x8x32xbf16>, vector<1x8x32xf32> -> vector<1x8x32xf32>
    "tpu.trace_stop"() : () -> ()
    %213 = arith.subf %196, %212 : vector<1x8x32xf32>
    %c0_67 = arith.constant 0 : index
    %c0_68 = arith.constant 0 : index
    %214 = vector.load %arg11[%c0_67, %c0_68] : memref<1x32xf32, #tpu.memory_space<vmem>>, vector<1x32xf32>
    %c0_69 = arith.constant 0 : index
    %c0_70 = arith.constant 0 : index
    %215 = vector.load %arg12[%c0_69, %c0_70] : memref<1x32xf32, #tpu.memory_space<vmem>>, vector<1x32xf32>
    %cst_71 = arith.constant dense<0.000000e+00> : vector<1x8xf32>
    %216 = vector.multi_reduction <add>, %145, %cst_71 [2] : vector<1x8x32xf32> to vector<1x8xf32>
    %217 = vector.shape_cast %216 : vector<1x8xf32> to vector<1x8x1xf32>
    %cst_72 = arith.constant 3.200000e+01 : f32
    %218 = vector.broadcast %cst_72 : f32 to vector<1x8x1xf32>
    %219 = arith.divf %217, %218 : vector<1x8x1xf32>
    %220 = vector.broadcast %219 : vector<1x8x1xf32> to vector<1x8x32xf32>
    %221 = arith.subf %145, %220 : vector<1x8x32xf32>
    %222 = arith.mulf %221, %221 : vector<1x8x32xf32>
    %cst_73 = arith.constant dense<0.000000e+00> : vector<1x8xf32>
    %223 = vector.multi_reduction <add>, %222, %cst_73 [2] : vector<1x8x32xf32> to vector<1x8xf32>
    %224 = vector.shape_cast %223 : vector<1x8xf32> to vector<1x8x1xf32>
    %cst_74 = arith.constant 3.200000e+01 : f32
    %225 = vector.broadcast %cst_74 : f32 to vector<1x8x1xf32>
    %226 = arith.divf %224, %225 : vector<1x8x1xf32>
    %227 = vector.broadcast %219 : vector<1x8x1xf32> to vector<1x8x32xf32>
    %228 = arith.subf %145, %227 : vector<1x8x32xf32>
    %cst_75 = arith.constant 9.99999974E-6 : f32
    %229 = vector.broadcast %cst_75 : f32 to vector<1x8x1xf32>
    %230 = arith.addf %226, %229 : vector<1x8x1xf32>
    %231 = math.rsqrt %230 : vector<1x8x1xf32>
    %232 = vector.broadcast %231 : vector<1x8x1xf32> to vector<1x8x32xf32>
    %233 = arith.mulf %228, %232 : vector<1x8x32xf32>
    %234 = vector.shape_cast %214 : vector<1x32xf32> to vector<1x1x32xf32>
    %235 = vector.broadcast %234 : vector<1x1x32xf32> to vector<1x8x32xf32>
    %236 = arith.mulf %233, %235 : vector<1x8x32xf32>
    %237 = vector.shape_cast %215 : vector<1x32xf32> to vector<1x1x32xf32>
    %238 = vector.broadcast %237 : vector<1x1x32xf32> to vector<1x8x32xf32>
    %239 = arith.addf %236, %238 : vector<1x8x32xf32>
    %cst_76 = arith.constant dense<0.000000e+00> : vector<1x8xf32>
    %240 = vector.multi_reduction <add>, %213, %cst_76 [2] : vector<1x8x32xf32> to vector<1x8xf32>
    %241 = vector.shape_cast %240 : vector<1x8xf32> to vector<1x8x1xf32>
    %cst_77 = arith.constant 3.200000e+01 : f32
    %242 = vector.broadcast %cst_77 : f32 to vector<1x8x1xf32>
    %243 = arith.divf %241, %242 : vector<1x8x1xf32>
    %244 = vector.broadcast %243 : vector<1x8x1xf32> to vector<1x8x32xf32>
    %245 = arith.subf %213, %244 : vector<1x8x32xf32>
    %246 = arith.mulf %245, %245 : vector<1x8x32xf32>
    %cst_78 = arith.constant dense<0.000000e+00> : vector<1x8xf32>
    %247 = vector.multi_reduction <add>, %246, %cst_78 [2] : vector<1x8x32xf32> to vector<1x8xf32>
    %248 = vector.shape_cast %247 : vector<1x8xf32> to vector<1x8x1xf32>
    %cst_79 = arith.constant 3.200000e+01 : f32
    %249 = vector.broadcast %cst_79 : f32 to vector<1x8x1xf32>
    %250 = arith.divf %248, %249 : vector<1x8x1xf32>
    %251 = vector.broadcast %243 : vector<1x8x1xf32> to vector<1x8x32xf32>
    %252 = arith.subf %213, %251 : vector<1x8x32xf32>
    %cst_80 = arith.constant 9.99999974E-6 : f32
    %253 = vector.broadcast %cst_80 : f32 to vector<1x8x1xf32>
    %254 = arith.addf %250, %253 : vector<1x8x1xf32>
    %255 = math.rsqrt %254 : vector<1x8x1xf32>
    %256 = vector.broadcast %255 : vector<1x8x1xf32> to vector<1x8x32xf32>
    %257 = arith.mulf %252, %256 : vector<1x8x32xf32>
    %258 = vector.shape_cast %214 : vector<1x32xf32> to vector<1x1x32xf32>
    %259 = vector.broadcast %258 : vector<1x1x32xf32> to vector<1x8x32xf32>
    %260 = arith.mulf %257, %259 : vector<1x8x32xf32>
    %261 = vector.shape_cast %215 : vector<1x32xf32> to vector<1x1x32xf32>
    %262 = vector.broadcast %261 : vector<1x1x32xf32> to vector<1x8x32xf32>
    %263 = arith.addf %260, %262 : vector<1x8x32xf32>
    %264 = tpu.concatenate %239, %263 in 2 : vector<1x8x32xf32>, vector<1x8x32xf32> -> vector<1x8x64xf32>
    %c0_81 = arith.constant 0 : index
    %c0_82 = arith.constant 0 : index
    %c0_83 = arith.constant 0 : index
    %265 = vector.load %arg13[%c0_81, %c0_82, %c0_83] : memref<1x8x64xf32, #tpu.memory_space<vmem>>, vector<1x8x64xf32>
    tpu.vector_store %arg13[%c0_81, %c0_82, %c0_83], %264 {strides = array<i32>} : memref<1x8x64xf32, #tpu.memory_space<vmem>>, vector<1x8x64xf32>,
    return
  }
  func.func @transform_0(%arg0: i32) -> (i32, i32, i32) {
    %c0_i32 = arith.constant 0 : i32
    %c0_i32_0 = arith.constant 0 : i32
    %c0_i32_1 = arith.constant 0 : i32
    return %arg0, %c0_i32, %c0_i32_0 : i32, i32, i32
  }
  func.func @transform_1(%arg0: i32) -> (i32, i32, i32) {
    %c0_i32 = arith.constant 0 : i32
    %c0_i32_0 = arith.constant 0 : i32
    %c0_i32_1 = arith.constant 0 : i32
    return %arg0, %c0_i32, %c0_i32_0 : i32, i32, i32
  }
  func.func @transform_2(%arg0: i32) -> (i32, i32) {
    %c0_i32 = arith.constant 0 : i32
    %c0_i32_0 = arith.constant 0 : i32
    %c0_i32_1 = arith.constant 0 : i32
    return %c0_i32, %c0_i32_0 : i32, i32
  }
  func.func @transform_3(%arg0: i32) -> (i32, i32) {
    %c0_i32 = arith.constant 0 : i32
    %c0_i32_0 = arith.constant 0 : i32
    %c0_i32_1 = arith.constant 0 : i32
    return %c0_i32, %c0_i32_0 : i32, i32
  }
  func.func @transform_4(%arg0: i32) -> (i32, i32) {
    %c0_i32 = arith.constant 0 : i32
    %c0_i32_0 = arith.constant 0 : i32
    %c0_i32_1 = arith.constant 0 : i32
    return %c0_i32, %c0_i32_0 : i32, i32
  }
  func.func @transform_5(%arg0: i32) -> (i32, i32) {
    %c0_i32 = arith.constant 0 : i32
    %c0_i32_0 = arith.constant 0 : i32
    %c0_i32_1 = arith.constant 0 : i32
    return %c0_i32, %c0_i32_0 : i32, i32
  }
  func.func @transform_6(%arg0: i32) -> (i32, i32) {
    %c0_i32 = arith.constant 0 : i32
    %c0_i32_0 = arith.constant 0 : i32
    %c0_i32_1 = arith.constant 0 : i32
    return %c0_i32, %c0_i32_0 : i32, i32
  }
  func.func @transform_7(%arg0: i32) -> (i32, i32) {
    %c0_i32 = arith.constant 0 : i32
    %c0_i32_0 = arith.constant 0 : i32
    %c0_i32_1 = arith.constant 0 : i32
    return %c0_i32, %c0_i32_0 : i32, i32
  }
  func.func @transform_8(%arg0: i32) -> (i32, i32) {
    %c0_i32 = arith.constant 0 : i32
    %c0_i32_0 = arith.constant 0 : i32
    %c0_i32_1 = arith.constant 0 : i32
    return %c0_i32, %c0_i32_0 : i32, i32
  }
  func.func @transform_9(%arg0: i32) -> (i32, i32) {
    %c0_i32 = arith.constant 0 : i32
    %c0_i32_0 = arith.constant 0 : i32
    %c0_i32_1 = arith.constant 0 : i32
    return %c0_i32, %c0_i32_0 : i32, i32
  }
  func.func @transform_10(%arg0: i32) -> (i32, i32) {
    %c0_i32 = arith.constant 0 : i32
    %c0_i32_0 = arith.constant 0 : i32
    %c0_i32_1 = arith.constant 0 : i32
    return %c0_i32, %c0_i32_0 : i32, i32
  }
  func.func @transform_11(%arg0: i32) -> (i32, i32) {
    %c0_i32 = arith.constant 0 : i32
    %c0_i32_0 = arith.constant 0 : i32
    %c0_i32_1 = arith.constant 0 : i32
    return %c0_i32, %c0_i32_0 : i32, i32
  }
  func.func @transform_12(%arg0: i32) -> (i32, i32, i32) {
    %c0_i32 = arith.constant 0 : i32
    %c0_i32_0 = arith.constant 0 : i32
    %c0_i32_1 = arith.constant 0 : i32
    return %arg0, %c0_i32, %c0_i32_0 : i32, i32, i32
  }
}

</mosaic_0001>

<llo_original>
// kernel: self_attention_t_forward.1
$region0: #{self_attention_t_forward.1}
  #allocation0 [shape = 'u32[]', space=smem, size = 0x4, offset = 0x4, fixed_abs, tag = 'smem constant byte address 0x4 - core index']
  #allocation1 [shape = 'u32[72,128]{1,0:T(1,128)}', space=vmem, size = 0x9000, scoped, tag = 'internal scratch']
  %s0 = inlined_call_operand.vmem [shape: f32[2,8,4], index: 0, kind: input, shape index: {}]
  %s1 = inlined_call_operand.vmem [shape: f32[2,8,4], index: 1, kind: input, shape index: {}]
  %s2 = inlined_call_operand.vmem [shape: f32[1,4], index: 2, kind: input, shape index: {}]
  %s3 = inlined_call_operand.vmem [shape: f32[1,4], index: 3, kind: input, shape index: {}]
  %s4 = inlined_call_operand.vmem [shape: bf16[8,256], index: 4, kind: input, shape index: {}]
  %s5 = inlined_call_operand.vmem [shape: f32[1,256], index: 5, kind: input, shape index: {}]
  %s6 = inlined_call_operand.vmem [shape: bf16[8,256], index: 6, kind: input, shape index: {}]
  %s7 = inlined_call_operand.vmem [shape: f32[1,256], index: 7, kind: input, shape index: {}]
  %s8 = inlined_call_operand.vmem [shape: bf16[8,256], index: 8, kind: input, shape index: {}]
  %s9 = inlined_call_operand.vmem [shape: f32[1,256], index: 9, kind: input, shape index: {}]
  %s10 = inlined_call_operand.vmem [shape: f32[1,32], index: 10, kind: input, shape index: {}]
  %s11 = inlined_call_operand.vmem [shape: f32[1,32], index: 11, kind: input, shape index: {}]
  %s12 = inlined_call_operand.vmem [shape: f32[2,8,64], index: 12, kind: output, shape index: {}]
  %s13 = sld [smem:[#allocation0]]
  $region81: #{self_attention_t_forward.1} parent=0
    _
  %s15 = ssub.s32 1, %s13
  %s16 = scalar_select 0, %s15, %s13
  loop: start=0, step=1, limit=4
  $region2: #{self_attention_t_forward.1} parent=0 // loop_pre_header
    _
  $region3: #{self_attention_t_forward.1} parent=0 // loop_header
    %s18 = sphi 0, %s22
    %p19 = scmp.ge.s32.totalorder %s18, 4
    %s28 = sphi 0, %s30
    %s31 = sphi 0, %s28
    %s32 = sphi 0, %s31
    %s48 = sphi 0, %s32
    %s54 = sphi 0, %s56
    %s57 = sphi 0, %s54
    %s58 = sphi 0, %s57
    %s74 = sphi 0, %s58
    %s78 = sphi 0, %s78
    %s80 = sphi 0, %s78
    %s81 = sphi 0, %s80
    %s95 = sphi 0, %s81
    %s99 = sphi 0, %s99
    %s101 = sphi 0, %s99
    %s102 = sphi 0, %s101
    %s116 = sphi 0, %s102
    %s120 = sphi 0, %s120
    %s122 = sphi 0, %s120
    %s123 = sphi 0, %s122
    %s137 = sphi 0, %s123
    %s141 = sphi 0, %s141
    %s143 = sphi 0, %s141
    %s144 = sphi 0, %s143
    %s158 = sphi 0, %s144
    %s162 = sphi 0, %s162
    %s164 = sphi 0, %s162
    %s165 = sphi 0, %s164
    %s179 = sphi 0, %s165
    %s183 = sphi 0, %s183
    %s185 = sphi 0, %s183
    %s186 = sphi 0, %s185
    %s200 = sphi 0, %s186
    %s204 = sphi 0, %s204
    %s206 = sphi 0, %s204
    %s207 = sphi 0, %s206
    %s221 = sphi 0, %s207
    %s225 = sphi 0, %s225
    %s227 = sphi 0, %s225
    %s228 = sphi 0, %s227
    %s242 = sphi 0, %s228
    %s246 = sphi 0, %s246
    %s248 = sphi 0, %s246
    %s249 = sphi 0, %s248
    %s263 = sphi 0, %s249
    %s267 = sphi 0, %s267
    %s269 = sphi 0, %s267
    %s270 = sphi 0, %s269
    %s284 = sphi 0, %s270
    %s290 = sphi 0, %s292
    %s293 = sphi 0, %s290
    %s294 = sphi 0, %s293
    %s310 = sphi 0, %s294
  $region4: #{self_attention_t_forward.1} parent=0 // loop_header_branch
    %21 = sbr.rel (%p19) target = $region8
  $region5: #{self_attention_t_forward.1} parent=0 // loop_body
    %s23 = ssub.s32 %s18, 1
    %s24 = ssub.s32 %s18, 2
    %s25 = sadd.s32 %s18, 1
    %s26 = ssub.s32 %s18, %s25
    %p27 = scmp.eq.s32.totalorder %s26, 0
    %s29 = sadd.s32 %s28, 1
    %s30 = scalar_select %p27, %s28, %s29
    %p33 = pneg %p27
    %p34 = scmp.eq.s32.totalorder %s18, 1
    %p35 = por %p33, %p34
    %p36 = scmp.ne.s32.totalorder %s28, %s31
    %p37 = scmp.eq.s32.totalorder %s18, 0
    %p38 = por %p36, %p37
    %p39 = scmp.ne.s32.totalorder %s28, %s31
    %p40 = scmp.eq.s32.totalorder %s23, 1
    %p41 = por %p39, %p40
    %p42 = scmp.ne.s32.totalorder %s31, %s32
    %p43 = scmp.eq.s32.totalorder %s23, 0
    %p44 = por %p42, %p43
    %p45 = scmp.ne.s32.totalorder %s31, %s32
    %p46 = scmp.eq.s32.totalorder %s24, 1
    %p47 = por %p45, %p46
    %p49 = scmp.ne.s32.totalorder %s32, %s48
    %p50 = scmp.eq.s32.totalorder %s24, 0
    %p51 = por %p49, %p50
    %s52 = ssub.s32 %s18, %s25
    %p53 = scmp.eq.s32.totalorder %s52, 0
    %s55 = sadd.s32 %s54, 1
    %s56 = scalar_select %p53, %s54, %s55
    %p59 = pneg %p53
    %p60 = scmp.eq.s32.totalorder %s18, 1
    %p61 = por %p59, %p60
    %p62 = scmp.ne.s32.totalorder %s54, %s57
    %p63 = scmp.eq.s32.totalorder %s18, 0
    %p64 = por %p62, %p63
    %p65 = scmp.ne.s32.totalorder %s54, %s57
    %p66 = scmp.eq.s32.totalorder %s23, 1
    %p67 = por %p65, %p66
    %p68 = scmp.ne.s32.totalorder %s57, %s58
    %p69 = scmp.eq.s32.totalorder %s23, 0
    %p70 = por %p68, %p69
    %p71 = scmp.ne.s32.totalorder %s57, %s58
    %p72 = scmp.eq.s32.totalorder %s24, 1
    %p73 = por %p71, %p72
    %p75 = scmp.ne.s32.totalorder %s58, %s74
    %p76 = scmp.eq.s32.totalorder %s24, 0
    %p77 = por %p75, %p76
    %s79 = sadd.s32 %s78, 1
    %p82 = scmp.eq.s32.totalorder %s18, 1
    %p83 = scmp.ne.s32.totalorder %s78, %s80
    %p84 = scmp.eq.s32.totalorder %s18, 0
    %p85 = por %p83, %p84
    %p86 = scmp.ne.s32.totalorder %s78, %s80
    %p87 = scmp.eq.s32.totalorder %s23, 1
    %p88 = por %p86, %p87
    %p89 = scmp.ne.s32.totalorder %s80, %s81
    %p90 = scmp.eq.s32.totalorder %s23, 0
    %p91 = por %p89, %p90
    %p92 = scmp.ne.s32.totalorder %s80, %s81
    %p93 = scmp.eq.s32.totalorder %s24, 1
    %p94 = por %p92, %p93
    %p96 = scmp.ne.s32.totalorder %s81, %s95
    %p97 = scmp.eq.s32.totalorder %s24, 0
    %p98 = por %p96, %p97
    %s100 = sadd.s32 %s99, 1
    %p103 = scmp.eq.s32.totalorder %s18, 1
    %p104 = scmp.ne.s32.totalorder %s99, %s101
    %p105 = scmp.eq.s32.totalorder %s18, 0
    %p106 = por %p104, %p105
    %p107 = scmp.ne.s32.totalorder %s99, %s101
    %p108 = scmp.eq.s32.totalorder %s23, 1
    %p109 = por %p107, %p108
    %p110 = scmp.ne.s32.totalorder %s101, %s102
    %p111 = scmp.eq.s32.totalorder %s23, 0
    %p112 = por %p110, %p111
    %p113 = scmp.ne.s32.totalorder %s101, %s102
    %p114 = scmp.eq.s32.totalorder %s24, 1
    %p115 = por %p113, %p114
    %p117 = scmp.ne.s32.totalorder %s102, %s116
    %p118 = scmp.eq.s32.totalorder %s24, 0
    %p119 = por %p117, %p118
    %s121 = sadd.s32 %s120, 1
    %p124 = scmp.eq.s32.totalorder %s18, 1
    %p125 = scmp.ne.s32.totalorder %s120, %s122
    %p126 = scmp.eq.s32.totalorder %s18, 0
    %p127 = por %p125, %p126
    %p128 = scmp.ne.s32.totalorder %s120, %s122
    %p129 = scmp.eq.s32.totalorder %s23, 1
    %p130 = por %p128, %p129
    %p131 = scmp.ne.s32.totalorder %s122, %s123
    %p132 = scmp.eq.s32.totalorder %s23, 0
    %p133 = por %p131, %p132
    %p134 = scmp.ne.s32.totalorder %s122, %s123
    %p135 = scmp.eq.s32.totalorder %s24, 1
    %p136 = por %p134, %p135
    %p138 = scmp.ne.s32.totalorder %s123, %s137
    %p139 = scmp.eq.s32.totalorder %s24, 0
    %p140 = por %p138, %p139
    %s142 = sadd.s32 %s141, 1
    %p145 = scmp.eq.s32.totalorder %s18, 1
    %p146 = scmp.ne.s32.totalorder %s141, %s143
    %p147 = scmp.eq.s32.totalorder %s18, 0
    %p148 = por %p146, %p147
    %p149 = scmp.ne.s32.totalorder %s141, %s143
    %p150 = scmp.eq.s32.totalorder %s23, 1
    %p151 = por %p149, %p150
    %p152 = scmp.ne.s32.totalorder %s143, %s144
    %p153 = scmp.eq.s32.totalorder %s23, 0
    %p154 = por %p152, %p153
    %p155 = scmp.ne.s32.totalorder %s143, %s144
    %p156 = scmp.eq.s32.totalorder %s24, 1
    %p157 = por %p155, %p156
    %p159 = scmp.ne.s32.totalorder %s144, %s158
    %p160 = scmp.eq.s32.totalorder %s24, 0
    %p161 = por %p159, %p160
    %s163 = sadd.s32 %s162, 1
    %p166 = scmp.eq.s32.totalorder %s18, 1
    %p167 = scmp.ne.s32.totalorder %s162, %s164
    %p168 = scmp.eq.s32.totalorder %s18, 0
    %p169 = por %p167, %p168
    %p170 = scmp.ne.s32.totalorder %s162, %s164
    %p171 = scmp.eq.s32.totalorder %s23, 1
    %p172 = por %p170, %p171
    %p173 = scmp.ne.s32.totalorder %s164, %s165
    %p174 = scmp.eq.s32.totalorder %s23, 0
    %p175 = por %p173, %p174
    %p176 = scmp.ne.s32.totalorder %s164, %s165
    %p177 = scmp.eq.s32.totalorder %s24, 1
    %p178 = por %p176, %p177
    %p180 = scmp.ne.s32.totalorder %s165, %s179
    %p181 = scmp.eq.s32.totalorder %s24, 0
    %p182 = por %p180, %p181
    %s184 = sadd.s32 %s183, 1
    %p187 = scmp.eq.s32.totalorder %s18, 1
    %p188 = scmp.ne.s32.totalorder %s183, %s185
    %p189 = scmp.eq.s32.totalorder %s18, 0
    %p190 = por %p188, %p189
    %p191 = scmp.ne.s32.totalorder %s183, %s185
    %p192 = scmp.eq.s32.totalorder %s23, 1
    %p193 = por %p191, %p192
    %p194 = scmp.ne.s32.totalorder %s185, %s186
    %p195 = scmp.eq.s32.totalorder %s23, 0
    %p196 = por %p194, %p195
    %p197 = scmp.ne.s32.totalorder %s185, %s186
    %p198 = scmp.eq.s32.totalorder %s24, 1
    %p199 = por %p197, %p198
    %p201 = scmp.ne.s32.totalorder %s186, %s200
    %p202 = scmp.eq.s32.totalorder %s24, 0
    %p203 = por %p201, %p202
    %s205 = sadd.s32 %s204, 1
    %p208 = scmp.eq.s32.totalorder %s18, 1
    %p209 = scmp.ne.s32.totalorder %s204, %s206
    %p210 = scmp.eq.s32.totalorder %s18, 0
    %p211 = por %p209, %p210
    %p212 = scmp.ne.s32.totalorder %s204, %s206
    %p213 = scmp.eq.s32.totalorder %s23, 1
    %p214 = por %p212, %p213
    %p215 = scmp.ne.s32.totalorder %s206, %s207
    %p216 = scmp.eq.s32.totalorder %s23, 0
    %p217 = por %p215, %p216
    %p218 = scmp.ne.s32.totalorder %s206, %s207
    %p219 = scmp.eq.s32.totalorder %s24, 1
    %p220 = por %p218, %p219
    %p222 = scmp.ne.s32.totalorder %s207, %s221
    %p223 = scmp.eq.s32.totalorder %s24, 0
    %p224 = por %p222, %p223
    %s226 = sadd.s32 %s225, 1
    %p229 = scmp.eq.s32.totalorder %s18, 1
    %p230 = scmp.ne.s32.totalorder %s225, %s227
    %p231 = scmp.eq.s32.totalorder %s18, 0
    %p232 = por %p230, %p231
    %p233 = scmp.ne.s32.totalorder %s225, %s227
    %p234 = scmp.eq.s32.totalorder %s23, 1
    %p235 = por %p233, %p234
    %p236 = scmp.ne.s32.totalorder %s227, %s228
    %p237 = scmp.eq.s32.totalorder %s23, 0
    %p238 = por %p236, %p237
    %p239 = scmp.ne.s32.totalorder %s227, %s228
    %p240 = scmp.eq.s32.totalorder %s24, 1
    %p241 = por %p239, %p240
    %p243 = scmp.ne.s32.totalorder %s228, %s242
    %p244 = scmp.eq.s32.totalorder %s24, 0
    %p245 = por %p243, %p244
    %s247 = sadd.s32 %s246, 1
    %p250 = scmp.eq.s32.totalorder %s18, 1
    %p251 = scmp.ne.s32.totalorder %s246, %s248
    %p252 = scmp.eq.s32.totalorder %s18, 0
    %p253 = por %p251, %p252
    %p254 = scmp.ne.s32.totalorder %s246, %s248
    %p255 = scmp.eq.s32.totalorder %s23, 1
    %p256 = por %p254, %p255
    %p257 = scmp.ne.s32.totalorder %s248, %s249
    %p258 = scmp.eq.s32.totalorder %s23, 0
    %p259 = por %p257, %p258
    %p260 = scmp.ne.s32.totalorder %s248, %s249
    %p261 = scmp.eq.s32.totalorder %s24, 1
    %p262 = por %p260, %p261
    %p264 = scmp.ne.s32.totalorder %s249, %s263
    %p265 = scmp.eq.s32.totalorder %s24, 0
    %p266 = por %p264, %p265
    %s268 = sadd.s32 %s267, 1
    %p271 = scmp.eq.s32.totalorder %s18, 1
    %p272 = scmp.ne.s32.totalorder %s267, %s269
    %p273 = scmp.eq.s32.totalorder %s18, 0
    %p274 = por %p272, %p273
    %p275 = scmp.ne.s32.totalorder %s267, %s269
    %p276 = scmp.eq.s32.totalorder %s23, 1
    %p277 = por %p275, %p276
    %p278 = scmp.ne.s32.totalorder %s269, %s270
    %p279 = scmp.eq.s32.totalorder %s23, 0
    %p280 = por %p278, %p279
    %p281 = scmp.ne.s32.totalorder %s269, %s270
    %p282 = scmp.eq.s32.totalorder %s24, 1
    %p283 = por %p281, %p282
    %p285 = scmp.ne.s32.totalorder %s270, %s284
    %p286 = scmp.eq.s32.totalorder %s24, 0
    %p287 = por %p285, %p286
    %s288 = ssub.s32 %s18, %s25
    %p289 = scmp.eq.s32.totalorder %s288, 0
    %s291 = sadd.s32 %s290, 1
    %s292 = scalar_select %p289, %s290, %s291
    %p295 = pneg %p289
    %p296 = scmp.eq.s32.totalorder %s18, 1
    %p297 = por %p295, %p296
    %p298 = scmp.ne.s32.totalorder %s290, %s293
    %p299 = scmp.eq.s32.totalorder %s18, 0
    %p300 = por %p298, %p299
    %p301 = scmp.ne.s32.totalorder %s290, %s293
    %p302 = scmp.eq.s32.totalorder %s23, 1
    %p303 = por %p301, %p302
    %p304 = scmp.ne.s32.totalorder %s293, %s294
    %p305 = scmp.eq.s32.totalorder %s23, 0
    %p306 = por %p304, %p305
    %p307 = scmp.ne.s32.totalorder %s293, %s294
    %p308 = scmp.eq.s32.totalorder %s24, 1
    %p309 = por %p307, %p308
    %p311 = scmp.ne.s32.totalorder %s294, %s310
    %p312 = scmp.eq.s32.totalorder %s24, 0
    %p313 = por %p311, %p312
    %p314 = scmp.le.s32.totalorder 1, %s18
    %p315 = scmp.lt.s32.totalorder %s18, 3
    %p316 = pnand %p314, %p315
    %p317 = pneg %p316
    // Predicated region
    $region9: #{self_attention_t_forward.1} parent=5 // pred_check
      _
    $region10: #{self_attention_t_forward.1} parent=5 // pred_check_branch
      %319 = sbr.rel (%p316) target = $region12
    $region11: #{self_attention_t_forward.1} parent=5 // pred_region
      %s320 = ssub.s32 %s18, 1
      // Predicated region
      $region13: #{self_attention_t_forward.1} parent=11 // pred_check
        %p321 = pneg %p91
      $region14: #{self_attention_t_forward.1} parent=11 // pred_check_branch
        %323 = sbr.rel (%p321) target = $region16
      $region15: #{self_attention_t_forward.1} parent=11 // pred_region
        _
      $region16: #{self_attention_t_forward.1} parent=11 // pred_fallthru
        _
      // Predicated region
      $region17: #{self_attention_t_forward.1} parent=11 // pred_check
        %p324 = pneg %p112
      $region18: #{self_attention_t_forward.1} parent=11 // pred_check_branch
        %326 = sbr.rel (%p324) target = $region20
      $region19: #{self_attention_t_forward.1} parent=11 // pred_region
        _
      $region20: #{self_attention_t_forward.1} parent=11 // pred_fallthru
        _
      // Predicated region
      $region21: #{self_attention_t_forward.1} parent=11 // pred_check
        %p327 = pneg %p133
      $region22: #{self_attention_t_forward.1} parent=11 // pred_check_branch
        %329 = sbr.rel (%p327) target = $region24
      $region23: #{self_attention_t_forward.1} parent=11 // pred_region
        _
      $region24: #{self_attention_t_forward.1} parent=11 // pred_fallthru
        _
      // Predicated region
      $region25: #{self_attention_t_forward.1} parent=11 // pred_check
        %p330 = pneg %p154
      $region26: #{self_attention_t_forward.1} parent=11 // pred_check_branch
        %332 = sbr.rel (%p330) target = $region28
      $region27: #{self_attention_t_forward.1} parent=11 // pred_region
        _
      $region28: #{self_attention_t_forward.1} parent=11 // pred_fallthru
        _
      // Predicated region
      $region29: #{self_attention_t_forward.1} parent=11 // pred_check
        %p333 = pneg %p175
      $region30: #{self_attention_t_forward.1} parent=11 // pred_check_branch
        %335 = sbr.rel (%p333) target = $region32
      $region31: #{self_attention_t_forward.1} parent=11 // pred_region
        _
      $region32: #{self_attention_t_forward.1} parent=11 // pred_fallthru
        _
      // Predicated region
      $region33: #{self_attention_t_forward.1} parent=11 // pred_check
        %p336 = pneg %p196
      $region34: #{self_attention_t_forward.1} parent=11 // pred_check_branch
        %338 = sbr.rel (%p336) target = $region36
      $region35: #{self_attention_t_forward.1} parent=11 // pred_region
        _
      $region36: #{self_attention_t_forward.1} parent=11 // pred_fallthru
        _
      // Predicated region
      $region37: #{self_attention_t_forward.1} parent=11 // pred_check
        %p339 = pneg %p217
      $region38: #{self_attention_t_forward.1} parent=11 // pred_check_branch
        %341 = sbr.rel (%p339) target = $region40
      $region39: #{self_attention_t_forward.1} parent=11 // pred_region
        _
      $region40: #{self_attention_t_forward.1} parent=11 // pred_fallthru
        _
      // Predicated region
      $region41: #{self_attention_t_forward.1} parent=11 // pred_check
        %p342 = pneg %p238
      $region42: #{self_attention_t_forward.1} parent=11 // pred_check_branch
        %344 = sbr.rel (%p342) target = $region44
      $region43: #{self_attention_t_forward.1} parent=11 // pred_region
        _
      $region44: #{self_attention_t_forward.1} parent=11 // pred_fallthru
        _
      // Predicated region
      $region45: #{self_attention_t_forward.1} parent=11 // pred_check
        %p345 = pneg %p259
      $region46: #{self_attention_t_forward.1} parent=11 // pred_check_branch
        %347 = sbr.rel (%p345) target = $region48
      $region47: #{self_attention_t_forward.1} parent=11 // pred_region
        _
      $region48: #{self_attention_t_forward.1} parent=11 // pred_fallthru
        _
      // Predicated region
      $region49: #{self_attention_t_forward.1} parent=11 // pred_check
        %p348 = pneg %p280
      $region50: #{self_attention_t_forward.1} parent=11 // pred_check_branch
        %350 = sbr.rel (%p348) target = $region52
      $region51: #{self_attention_t_forward.1} parent=11 // pred_region
        _
      $region52: #{self_attention_t_forward.1} parent=11 // pred_fallthru
        _
    $region12: #{self_attention_t_forward.1} parent=5 // pred_fallthru
      _
    %p351 = scmp.lt.s32.totalorder %s18, 2
    // Predicated region
    $region53: #{self_attention_t_forward.1} parent=5 // pred_check
      %p352 = pneg %p351
    $region54: #{self_attention_t_forward.1} parent=5 // pred_check_branch
      %354 = sbr.rel (%p352) target = $region56
    $region55: #{self_attention_t_forward.1} parent=5 // pred_region
      // Predicated region
      $region57: #{self_attention_t_forward.1} parent=55 // pred_check
        %p355 = pneg %p38
      $region58: #{self_attention_t_forward.1} parent=55 // pred_check_branch
        %357 = sbr.rel (%p355) target = $region60
      $region59: #{self_attention_t_forward.1} parent=55 // pred_region
        %p358 = scmp.lt.s32.totalorder %s18, 1
        %s359 = scalar_select %p358, %s18, 1
        %s360 = smul.addr %s359, 8
        %s361 = scalar_lea.vmem %s0, %s360
      $region60: #{self_attention_t_forward.1} parent=55 // pred_fallthru
        _
      // Predicated region
      $region61: #{self_attention_t_forward.1} parent=55 // pred_check
        %p362 = pneg %p64
      $region62: #{self_attention_t_forward.1} parent=55 // pred_check_branch
        %364 = sbr.rel (%p362) target = $region64
      $region63: #{self_attention_t_forward.1} parent=55 // pred_region
        %p365 = scmp.lt.s32.totalorder %s18, 1
        %s366 = scalar_select %p365, %s18, 1
        %s367 = smul.addr %s366, 8
        %s368 = scalar_lea.vmem %s1, %s367
      $region64: #{self_attention_t_forward.1} parent=55 // pred_fallthru
        _
    $region56: #{self_attention_t_forward.1} parent=5 // pred_fallthru
      _
    %p369 = scmp.le.s32.totalorder 1, %s18
    %p370 = scmp.lt.s32.totalorder %s18, 3
    %p371 = pnand %p369, %p370
    %p372 = pneg %p371
    // Predicated region
    $region65: #{self_attention_t_forward.1} parent=5 // pred_check
      _
    $region66: #{self_attention_t_forward.1} parent=5 // pred_check_branch
      %374 = sbr.rel (%p371) target = $region68
    $region67: #{self_attention_t_forward.1} parent=5 // pred_region
      %s375 = ssub.s32 %s18, 1
      %p376 = scmp.lt.s32.totalorder %s23, 1
      %s377 = scalar_select %p376, %s23, 1
      %s378 = smul.addr %s377, 8
      %s379 = scalar_lea.vmem %s0, %s378
      %p380 = pneg %p44
      %p381 = pneg %p41
      %p382 = scmp.lt.s32.totalorder %s23, 1
      %s383 = scalar_select %p382, %s23, 1
      %s384 = smul.addr %s383, 8
      %s385 = scalar_lea.vmem %s1, %s384
      %p386 = pneg %p70
      %p387 = pneg %p67
      %p388 = pneg %p91
      %p389 = pneg %p88
      %p390 = pneg %p112
      %p391 = pneg %p109
      %p392 = pneg %p133
      %p393 = pneg %p130
      %p394 = pneg %p154
      %p395 = pneg %p151
      %p396 = pneg %p175
      %p397 = pneg %p172
      %p398 = pneg %p196
      %p399 = pneg %p193
      %p400 = pneg %p217
      %p401 = pneg %p214
      %p402 = pneg %p238
      %p403 = pneg %p235
      %p404 = pneg %p259
      %p405 = pneg %p256
      %p406 = pneg %p280
      %p407 = pneg %p277
      %p408 = pneg %p306
      %p409 = pneg %p303
      %p410 = scmp.lt.s32.totalorder %s23, 1
      %s411 = scalar_select %p410, %s23, 1
      %s412 = smul.addr %s411, 8
      %s413 = scalar_lea.vmem %s12, %s412
      %p414 = scmp.lt.s32.totalorder %s23, 1
      %s415 = scalar_select %p414, %s23, 1
      %s416 = smul.addr %s415, 8
      %s417 = scalar_lea.vmem %s0, %s416
      %p418 = scmp.lt.s32.totalorder %s23, 1
      %s419 = scalar_select %p418, %s23, 1
      %s420 = smul.addr %s419, 8
      %s421 = scalar_lea.vmem %s1, %s420
      %p422 = scmp.lt.s32.totalorder %s23, 1
      %s423 = scalar_select %p422, %s23, 1
      %s424 = smul.addr %s423, 8
      %s425 = scalar_lea.vmem %s12, %s424
      %v427 = vld [vmem:[%s2] sm:$0x1]
      %v428 = vld [vmem:[%s3] sm:$0x1]
      %v429 = vld [vmem:[%s417] sm:$0xff]
      %vm430 = vcmask 31744
      %v431 = vsel %vm430, %v429, 0.0
      %432 = vadd.xlane.f32.xlu0 %v431
      %v433 = vpop.xlane.xlu0 %432
      %v434 = vrcp.pop 4.0
      %v435 = vmul.f32 4.0, %v434
      %v436 = vsub.f32 1.0, %v435
      %v437 = vmul.f32 %v434, %v436
      %v438 = vadd.f32 %v434, %v437
      %vm439 = vweird.f32 %v434
      %v440 = vsel %vm439, %v434, %v438
      %v441 = vmul.f32 %v433, %v440
      %v442 = vsub.f32 %v429, %v441
      %v443 = vmul.f32 %v442, %v442
      %v444 = vsel %vm430, %v443, 0.0
      %445 = vadd.xlane.f32.xlu0 %v444
      %v446 = vpop.xlane.xlu0 %445
      %v447 = vmul.f32 %v446, %v440
      %v448 = vadd.f32 %v447, 1e-05
      %v449 = vrsqrt.pop %v448
      %v450 = vmul.f32 %v449, %v448
      %v451 = vmul.f32 %v450, %v449
      %v452 = vmul.f32 0.5, %v451
      %v453 = vsub.f32 1.5, %v452
      %v454 = vmul.f32 %v449, %v453
      %vm455 = vweird.f32 %v448
      %vm456 = vweird.f32 %v449
      %vm457 = vmor %vm455, %vm456
      %v458 = vsel %vm457, %v449, %v454
      %v459 = vmul.f32 %v442, %v458
      %v461 = vperm.slane %v427, 0
      %v463 = vmul.f32 %v459, %v461
      %v465 = vperm.slane %v428, 0
      %v467 = vadd.f32 %v463, %v465
      %v468 = vld [vmem:[%s421] sm:$0xff]
      %v469 = vsel %vm430, %v468, 0.0
      %470 = vadd.xlane.f32.xlu0 %v469
      %v471 = vpop.xlane.xlu0 %470
      %v472 = vmul.f32 %v471, %v440
      %v473 = vsub.f32 %v468, %v472
      %v474 = vmul.f32 %v473, %v473
      %v475 = vsel %vm430, %v474, 0.0
      %476 = vadd.xlane.f32.xlu0 %v475
      %v477 = vpop.xlane.xlu0 %476
      %v478 = vmul.f32 %v477, %v440
      %v479 = vadd.f32 %v478, 1e-05
      %v480 = vrsqrt.pop %v479
      %v481 = vmul.f32 %v480, %v479
      %v482 = vmul.f32 %v481, %v480
      %v483 = vmul.f32 0.5, %v482
      %v484 = vsub.f32 1.5, %v483
      %v485 = vmul.f32 %v480, %v484
      %vm486 = vweird.f32 %v479
      %vm487 = vweird.f32 %v480
      %vm488 = vmor %vm486, %vm487
      %v489 = vsel %vm488, %v480, %v485
      %v490 = vmul.f32 %v473, %v489
      %v491 = vmul.f32 %v490, %v461
      %v492 = vadd.f32 %v491, %v465
      %494 = vrot.lane.b32.xlu0 %v492, 4
      %v495 = vpop.permute.xlu0 %494
      %v497 = vsel %vm430, %v467, %v495
      %v498 = vpack.c.bf16 %v497, %v497
      %v499 = vld [vmem:[%s4] sm:$0xff]
      %v500 = vld [vmem:[%s5] sm:$0x3]
      %v502 = vperm.slane %v500, 0
      %v503 = vperm.slane %v500, 1
      %v507 = vunpack.c.l.b16 %v499
      %v508 = vunpack.c.h.b16 %v499
      %v509 = vpack.c.b16 %v507, %v507
      %v510 = vpack.c.b16 %v508, %v508
      %vm511 = vcmask 64512
      %v513 = vsel %vm511, %v498, 0
      %vm515 = vcmask 1043456
      %v517 = vsel %vm515, %v509, 0
      %v520 = vsel %vm515, %v510, 0
      %522 = vmatpush.bf16.msra.mxu0 0
      %523 = vmatpush.bf16.msra.mxu0 0
      %524 = vmatpush.bf16.msra.mxu0 0
      %525 = vmatpush.bf16.msra.mxu0 0
      %526 = vmatpush.bf16.msra.mxu0 0
      %527 = vmatpush.bf16.msra.mxu0 0
      %528 = vmatpush.bf16.msra.mxu0 0
      %529 = vmatpush.bf16.msra.mxu0 %v517
      %530 = vmatmul.bf16.gmra.mxu0 %v513
      %v531 = vpop.f32.mrf.mxu0
      %v532 = vadd.f32 %v502, %v531
      %v533 = vpop.f32.mrf.mxu0
      %534 = vdwg.mxu0
      %535 = vmatpush.bf16.msra.mxu0 0
      %536 = vmatpush.bf16.msra.mxu0 0
      %537 = vmatpush.bf16.msra.mxu0 0
      %538 = vmatpush.bf16.msra.mxu0 0
      %539 = vmatpush.bf16.msra.mxu0 0
      %540 = vmatpush.bf16.msra.mxu0 0
      %541 = vmatpush.bf16.msra.mxu0 0
      %542 = vmatpush.bf16.msra.mxu0 %v520
      %543 = vmatmul.bf16.gmra.mxu0 %v513
      %v544 = vpop.f32.mrf.mxu0
      %v545 = vadd.f32 %v503, %v544
      %v546 = vpop.f32.mrf.mxu0
      %547 = vdwg.mxu0
      %v548 = vpack.c.bf16 %v545, %v532
      %v549 = vld [vmem:[%s6] sm:$0xff]
      %v550 = vld [vmem:[%s7] sm:$0x3]
      %v552 = vperm.slane %v550, 0
      %v553 = vperm.slane %v550, 1
      %v557 = vunpack.c.l.b16 %v549
      %v558 = vunpack.c.h.b16 %v549
      %v559 = vpack.c.b16 %v557, %v557
      %v560 = vpack.c.b16 %v558, %v558
      %v562 = vsel %vm515, %v559, 0
      %v565 = vsel %vm515, %v560, 0
      %567 = vmatpush.bf16.msra.mxu0 0
      %568 = vmatpush.bf16.msra.mxu0 0
      %569 = vmatpush.bf16.msra.mxu0 0
      %570 = vmatpush.bf16.msra.mxu0 0
      %571 = vmatpush.bf16.msra.mxu0 0
      %572 = vmatpush.bf16.msra.mxu0 0
      %573 = vmatpush.bf16.msra.mxu0 0
      %574 = vmatpush.bf16.msra.mxu0 %v562
      %575 = vmatmul.bf16.gmra.mxu0 %v513
      %v576 = vpop.f32.mrf.mxu0
      %v577 = vadd.f32 %v552, %v576
      %v578 = vpop.f32.mrf.mxu0
      %579 = vdwg.mxu0
      %580 = vmatpush.bf16.msra.mxu0 0
      %581 = vmatpush.bf16.msra.mxu0 0
      %582 = vmatpush.bf16.msra.mxu0 0
      %583 = vmatpush.bf16.msra.mxu0 0
      %584 = vmatpush.bf16.msra.mxu0 0
      %585 = vmatpush.bf16.msra.mxu0 0
      %586 = vmatpush.bf16.msra.mxu0 0
      %587 = vmatpush.bf16.msra.mxu0 %v565
      %588 = vmatmul.bf16.gmra.mxu0 %v513
      %v589 = vpop.f32.mrf.mxu0
      %v590 = vadd.f32 %v553, %v589
      %v591 = vpop.f32.mrf.mxu0
      %592 = vdwg.mxu0
      %v593 = vpack.c.bf16 %v590, %v577
      %v594 = vld [vmem:[%s8] sm:$0xff]
      %v595 = vld [vmem:[%s9] sm:$0x3]
      %v597 = vperm.slane %v595, 0
      %v598 = vperm.slane %v595, 1
      %v602 = vunpack.c.l.b16 %v594
      %v603 = vunpack.c.h.b16 %v594
      %v604 = vpack.c.b16 %v602, %v602
      %v605 = vpack.c.b16 %v603, %v603
      %v607 = vsel %vm515, %v604, 0
      %v610 = vsel %vm515, %v605, 0
      %612 = vmatpush.bf16.msra.mxu0 0
      %613 = vmatpush.bf16.msra.mxu0 0
      %614 = vmatpush.bf16.msra.mxu0 0
      %615 = vmatpush.bf16.msra.mxu0 0
      %616 = vmatpush.bf16.msra.mxu0 0
      %617 = vmatpush.bf16.msra.mxu0 0
      %618 = vmatpush.bf16.msra.mxu0 0
      %619 = vmatpush.bf16.msra.mxu0 %v607
      %620 = vmatmul.bf16.gmra.mxu0 %v513
      %v621 = vpop.f32.mrf.mxu0
      %v622 = vadd.f32 %v597, %v621
      %v623 = vpop.f32.mrf.mxu0
      %624 = vdwg.mxu0
      %625 = vmatpush.bf16.msra.mxu0 0
      %626 = vmatpush.bf16.msra.mxu0 0
      %627 = vmatpush.bf16.msra.mxu0 0
      %628 = vmatpush.bf16.msra.mxu0 0
      %629 = vmatpush.bf16.msra.mxu0 0
      %630 = vmatpush.bf16.msra.mxu0 0
      %631 = vmatpush.bf16.msra.mxu0 0
      %632 = vmatpush.bf16.msra.mxu0 %v610
      %633 = vmatmul.bf16.gmra.mxu0 %v513
      %v634 = vpop.f32.mrf.mxu0
      %v635 = vadd.f32 %v598, %v634
      %v636 = vpop.f32.mrf.mxu0
      %637 = vdwg.mxu0
      %v638 = vpack.c.bf16 %v635, %v622
      %vm639 = vcmask 261120
      %v641 = vsel %vm639, %v548, 0
      %v644 = vsel %vm639, %v593, 0
      %646 = vmatpush.bf16.xpose.msra.mxu0 0
      %647 = vmatpush.bf16.xpose.msra.mxu0 0
      %648 = vmatpush.bf16.xpose.msra.mxu0 0
      %649 = vmatpush.bf16.xpose.msra.mxu0 0
      %650 = vmatpush.bf16.xpose.msra.mxu0 0
      %651 = vmatpush.bf16.xpose.msra.mxu0 0
      %652 = vmatpush.bf16.xpose.msra.mxu0 0
      %653 = vmatpush.bf16.xpose.msra.mxu0 %v644
      %654 = vmatmul.bf16.gmra.mxu0 %v641
      %v655 = vpop.f32.mrf.mxu0
      %v656 = vadd.f32 0.0, %v655
      %v657 = vpop.f32.mrf.mxu0
      %658 = vdwg.mxu0
      %v659 = vsel %vm511, %v656, -inf
      %660 = vmax.xlane.f32.xlu0 %v659
      %v661 = vpop.xlane.xlu0 %660
      %v662 = vsub.f32 %v656, %v661
      %v663 = vmul.f32 %v662, 1.442695
      %v664 = vpow.pop %v663
      %v665 = vsel %vm511, %v664, 0.0
      %666 = vadd.xlane.f32.xlu0 %v665
      %v667 = vpop.xlane.xlu0 %666
      %v668 = vrcp.pop %v667
      %v669 = vmul.f32 %v664, %v668
      %v670 = vpack.c.bf16 %v669, %v669
      %v672 = vsel %vm511, %v670, 0
      %v675 = vsel %vm515, %v638, 0
      %677 = vmatpush.bf16.msra.mxu0 0
      %678 = vmatpush.bf16.msra.mxu0 0
      %679 = vmatpush.bf16.msra.mxu0 0
      %680 = vmatpush.bf16.msra.mxu0 0
      %681 = vmatpush.bf16.msra.mxu0 0
      %682 = vmatpush.bf16.msra.mxu0 0
      %683 = vmatpush.bf16.msra.mxu0 0
      %684 = vmatpush.bf16.msra.mxu0 %v675
      %685 = vmatmul.bf16.gmra.mxu0 %v672
      %v686 = vpop.f32.mrf.mxu0
      %v687 = vadd.f32 0.0, %v686
      %v688 = vpop.f32.mrf.mxu0
      %689 = vdwg.mxu0
      %v691 = vunpack.c.l.b16 %v548
      %v692 = vpack.c.b16 %v691, %v691
      %693 = vrot.lane.b32.xlu0 %v692, 96
      %v694 = vpop.permute.xlu0 %693
      %v696 = vunpack.c.l.b16 %v593
      %v697 = vpack.c.b16 %v696, %v696
      %698 = vrot.lane.b32.xlu0 %v697, 96
      %v699 = vpop.permute.xlu0 %698
      %v701 = vsel %vm639, %v694, 0
      %v704 = vsel %vm639, %v699, 0
      %706 = vmatpush.bf16.xpose.msra.mxu0 0
      %707 = vmatpush.bf16.xpose.msra.mxu0 0
      %708 = vmatpush.bf16.xpose.msra.mxu0 0
      %709 = vmatpush.bf16.xpose.msra.mxu0 0
      %710 = vmatpush.bf16.xpose.msra.mxu0 0
      %711 = vmatpush.bf16.xpose.msra.mxu0 0
      %712 = vmatpush.bf16.xpose.msra.mxu0 0
      %713 = vmatpush.bf16.xpose.msra.mxu0 %v704
      %714 = vmatmul.bf16.gmra.mxu0 %v701
      %v715 = vpop.f32.mrf.mxu0
      %v716 = vadd.f32 0.0, %v715
      %v717 = vpop.f32.mrf.mxu0
      %718 = vdwg.mxu0
      %v719 = vsel %vm511, %v716, -inf
      %720 = vmax.xlane.f32.xlu0 %v719
      %v721 = vpop.xlane.xlu0 %720
      %v722 = vsub.f32 %v716, %v721
      %v723 = vmul.f32 %v722, 1.442695
      %v724 = vpow.pop %v723
      %v725 = vsel %vm511, %v724, 0.0
      %726 = vadd.xlane.f32.xlu0 %v725
      %v727 = vpop.xlane.xlu0 %726
      %v728 = vrcp.pop %v727
      %v729 = vmul.f32 %v724, %v728
      %v730 = vpack.c.bf16 %v729, %v729
      %v732 = vunpack.c.l.b16 %v638
      %v733 = vpack.c.b16 %v732, %v732
      %734 = vrot.lane.b32.xlu0 %v733, 96
      %v735 = vpop.permute.xlu0 %734
      %v737 = vsel %vm511, %v730, 0
      %v740 = vsel %vm515, %v735, 0
      %742 = vmatpush.bf16.msra.mxu0 0
      %743 = vmatpush.bf16.msra.mxu0 0
      %744 = vmatpush.bf16.msra.mxu0 0
      %745 = vmatpush.bf16.msra.mxu0 0
      %746 = vmatpush.bf16.msra.mxu0 0
      %747 = vmatpush.bf16.msra.mxu0 0
      %748 = vmatpush.bf16.msra.mxu0 0
      %749 = vmatpush.bf16.msra.mxu0 %v740
      %750 = vmatmul.bf16.gmra.mxu0 %v737
      %v751 = vpop.f32.mrf.mxu0
      %v752 = vadd.f32 0.0, %v751
      %v753 = vpop.f32.mrf.mxu0
      %754 = vdwg.mxu0
      %v755 = vsub.f32 %v687, %v752
      %756 = vrot.lane.b32.xlu0 %v692, 64
      %v757 = vpop.permute.xlu0 %756
      %758 = vrot.lane.b32.xlu0 %v697, 64
      %v759 = vpop.permute.xlu0 %758
      %v761 = vsel %vm639, %v757, 0
      %v764 = vsel %vm639, %v759, 0
      %766 = vmatpush.bf16.xpose.msra.mxu0 0
      %767 = vmatpush.bf16.xpose.msra.mxu0 0
      %768 = vmatpush.bf16.xpose.msra.mxu0 0
      %769 = vmatpush.bf16.xpose.msra.mxu0 0
      %770 = vmatpush.bf16.xpose.msra.mxu0 0
      %771 = vmatpush.bf16.xpose.msra.mxu0 0
      %772 = vmatpush.bf16.xpose.msra.mxu0 0
      %773 = vmatpush.bf16.xpose.msra.mxu0 %v764
      %774 = vmatmul.bf16.gmra.mxu0 %v761
      %v775 = vpop.f32.mrf.mxu0
      %v776 = vadd.f32 0.0, %v775
      %v777 = vpop.f32.mrf.mxu0
      %778 = vdwg.mxu0
      %v779 = vsel %vm511, %v776, -inf
      %780 = vmax.xlane.f32.xlu0 %v779
      %v781 = vpop.xlane.xlu0 %780
      %v782 = vsub.f32 %v776, %v781
      %v783 = vmul.f32 %v782, 1.442695
      %v784 = vpow.pop %v783
      %v785 = vsel %vm511, %v784, 0.0
      %786 = vadd.xlane.f32.xlu0 %v785
      %v787 = vpop.xlane.xlu0 %786
      %v788 = vrcp.pop %v787
      %v789 = vmul.f32 %v784, %v788
      %v790 = vpack.c.bf16 %v789, %v789
      %791 = vrot.lane.b32.xlu0 %v733, 64
      %v792 = vpop.permute.xlu0 %791
      %v794 = vsel %vm511, %v790, 0
      %v797 = vsel %vm515, %v792, 0
      %799 = vmatpush.bf16.msra.mxu0 0
      %800 = vmatpush.bf16.msra.mxu0 0
      %801 = vmatpush.bf16.msra.mxu0 0
      %802 = vmatpush.bf16.msra.mxu0 0
      %803 = vmatpush.bf16.msra.mxu0 0
      %804 = vmatpush.bf16.msra.mxu0 0
      %805 = vmatpush.bf16.msra.mxu0 0
      %806 = vmatpush.bf16.msra.mxu0 %v797
      %807 = vmatmul.bf16.gmra.mxu0 %v794
      %v808 = vpop.f32.mrf.mxu0
      %v809 = vadd.f32 0.0, %v808
      %v810 = vpop.f32.mrf.mxu0
      %811 = vdwg.mxu0
      %v812 = vsub.f32 %v755, %v809
      %813 = vrot.lane.b32.xlu0 %v692, 32
      %v814 = vpop.permute.xlu0 %813
      %815 = vrot.lane.b32.xlu0 %v697, 32
      %v816 = vpop.permute.xlu0 %815
      %v818 = vsel %vm639, %v814, 0
      %v821 = vsel %vm639, %v816, 0
      %823 = vmatpush.bf16.xpose.msra.mxu0 0
      %824 = vmatpush.bf16.xpose.msra.mxu0 0
      %825 = vmatpush.bf16.xpose.msra.mxu0 0
      %826 = vmatpush.bf16.xpose.msra.mxu0 0
      %827 = vmatpush.bf16.xpose.msra.mxu0 0
      %828 = vmatpush.bf16.xpose.msra.mxu0 0
      %829 = vmatpush.bf16.xpose.msra.mxu0 0
      %830 = vmatpush.bf16.xpose.msra.mxu0 %v821
      %831 = vmatmul.bf16.gmra.mxu0 %v818
      %v832 = vpop.f32.mrf.mxu0
      %v833 = vadd.f32 0.0, %v832
      %v834 = vpop.f32.mrf.mxu0
      %835 = vdwg.mxu0
      %v836 = vsel %vm511, %v833, -inf
      %837 = vmax.xlane.f32.xlu0 %v836
      %v838 = vpop.xlane.xlu0 %837
      %v839 = vsub.f32 %v833, %v838
      %v840 = vmul.f32 %v839, 1.442695
      %v841 = vpow.pop %v840
      %v842 = vsel %vm511, %v841, 0.0
      %843 = vadd.xlane.f32.xlu0 %v842
      %v844 = vpop.xlane.xlu0 %843
      %v845 = vrcp.pop %v844
      %v846 = vmul.f32 %v841, %v845
      %v847 = vpack.c.bf16 %v846, %v846
      %848 = vrot.lane.b32.xlu0 %v733, 32
      %v849 = vpop.permute.xlu0 %848
      %v851 = vsel %vm511, %v847, 0
      %v854 = vsel %vm515, %v849, 0
      %856 = vmatpush.bf16.msra.mxu0 0
      %857 = vmatpush.bf16.msra.mxu0 0
      %858 = vmatpush.bf16.msra.mxu0 0
      %859 = vmatpush.bf16.msra.mxu0 0
      %860 = vmatpush.bf16.msra.mxu0 0
      %861 = vmatpush.bf16.msra.mxu0 0
      %862 = vmatpush.bf16.msra.mxu0 0
      %863 = vmatpush.bf16.msra.mxu0 %v854
      %864 = vmatmul.bf16.gmra.mxu0 %v851
      %v865 = vpop.f32.mrf.mxu0
      %v866 = vadd.f32 0.0, %v865
      %v867 = vpop.f32.mrf.mxu0
      %868 = vdwg.mxu0
      %v869 = vsub.f32 %v812, %v866
      %v870 = vrot.slane %v548, 4
      %v871 = vrot.slane %v593, 4
      %v873 = vsel %vm639, %v870, 0
      %v876 = vsel %vm639, %v871, 0
      %878 = vmatpush.bf16.xpose.msra.mxu0 0
      %879 = vmatpush.bf16.xpose.msra.mxu0 0
      %880 = vmatpush.bf16.xpose.msra.mxu0 0
      %881 = vmatpush.bf16.xpose.msra.mxu0 0
      %882 = vmatpush.bf16.xpose.msra.mxu0 0
      %883 = vmatpush.bf16.xpose.msra.mxu0 0
      %884 = vmatpush.bf16.xpose.msra.mxu0 0
      %885 = vmatpush.bf16.xpose.msra.mxu0 %v876
      %886 = vmatmul.bf16.gmra.mxu0 %v873
      %v887 = vpop.f32.mrf.mxu0
      %v888 = vadd.f32 0.0, %v887
      %v889 = vpop.f32.mrf.mxu0
      %890 = vdwg.mxu0
      %v891 = vsel %vm511, %v888, -inf
      %892 = vmax.xlane.f32.xlu0 %v891
      %v893 = vpop.xlane.xlu0 %892
      %v894 = vsub.f32 %v888, %v893
      %v895 = vmul.f32 %v894, 1.442695
      %v896 = vpow.pop %v895
      %v897 = vsel %vm511, %v896, 0.0
      %898 = vadd.xlane.f32.xlu0 %v897
      %v899 = vpop.xlane.xlu0 %898
      %v900 = vrcp.pop %v899
      %v901 = vmul.f32 %v896, %v900
      %v902 = vpack.c.bf16 %v901, %v901
      %903 = vrot.lane.b32.xlu0 %v548, 96
      %v904 = vpop.permute.xlu0 %903
      %v905 = vrot.slane %v904, 4
      %906 = vrot.lane.b32.xlu0 %v593, 96
      %v907 = vpop.permute.xlu0 %906
      %v908 = vrot.slane %v907, 4
      %v910 = vsel %vm639, %v905, 0
      %v913 = vsel %vm639, %v908, 0
      %915 = vmatpush.bf16.xpose.msra.mxu0 0
      %916 = vmatpush.bf16.xpose.msra.mxu0 0
      %917 = vmatpush.bf16.xpose.msra.mxu0 0
      %918 = vmatpush.bf16.xpose.msra.mxu0 0
      %919 = vmatpush.bf16.xpose.msra.mxu0 0
      %920 = vmatpush.bf16.xpose.msra.mxu0 0
      %921 = vmatpush.bf16.xpose.msra.mxu0 0
      %922 = vmatpush.bf16.xpose.msra.mxu0 %v913
      %923 = vmatmul.bf16.gmra.mxu0 %v910
      %v924 = vpop.f32.mrf.mxu0
      %v925 = vadd.f32 0.0, %v924
      %v926 = vpop.f32.mrf.mxu0
      %927 = vdwg.mxu0
      %v928 = vsel %vm511, %v925, -inf
      %929 = vmax.xlane.f32.xlu0 %v928
      %v930 = vpop.xlane.xlu0 %929
      %v931 = vsub.f32 %v925, %v930
      %v932 = vmul.f32 %v931, 1.442695
      %v933 = vpow.pop %v932
      %v934 = vsel %vm511, %v933, 0.0
      %935 = vadd.xlane.f32.xlu0 %v934
      %v936 = vpop.xlane.xlu0 %935
      %v937 = vrcp.pop %v936
      %v938 = vmul.f32 %v933, %v937
      %v939 = vpack.c.bf16 %v938, %v938
      %940 = vrot.lane.b32.xlu0 %v638, 96
      %v941 = vpop.permute.xlu0 %940
      %v942 = vrot.slane %v941, 4
      %v944 = vsel %vm511, %v939, 0
      %v947 = vsel %vm515, %v942, 0
      %949 = vmatpush.bf16.msra.mxu0 0
      %950 = vmatpush.bf16.msra.mxu0 0
      %951 = vmatpush.bf16.msra.mxu0 0
      %952 = vmatpush.bf16.msra.mxu0 0
      %953 = vmatpush.bf16.msra.mxu0 0
      %954 = vmatpush.bf16.msra.mxu0 0
      %955 = vmatpush.bf16.msra.mxu0 0
      %956 = vmatpush.bf16.msra.mxu0 %v947
      %957 = vmatmul.bf16.gmra.mxu0 %v944
      %v958 = vpop.f32.mrf.mxu0
      %v959 = vadd.f32 0.0, %v958
      %v960 = vpop.f32.mrf.mxu0
      %961 = vdwg.mxu0
      %v962 = vrot.slane %v638, 4
      %v964 = vsel %vm511, %v902, 0
      %v967 = vsel %vm515, %v962, 0
      %969 = vmatpush.bf16.msra.mxu0 0
      %970 = vmatpush.bf16.msra.mxu0 0
      %971 = vmatpush.bf16.msra.mxu0 0
      %972 = vmatpush.bf16.msra.mxu0 0
      %973 = vmatpush.bf16.msra.mxu0 0
      %974 = vmatpush.bf16.msra.mxu0 0
      %975 = vmatpush.bf16.msra.mxu0 0
      %976 = vmatpush.bf16.msra.mxu0 %v967
      %977 = vmatmul.bf16.gmra.mxu0 %v964
      %v978 = vpop.f32.mrf.mxu0
      %v979 = vadd.f32 %v959, %v978
      %v980 = vpop.f32.mrf.mxu0
      %981 = vdwg.mxu0
      %982 = vrot.lane.b32.xlu0 %v548, 64
      %v983 = vpop.permute.xlu0 %982
      %v984 = vrot.slane %v983, 4
      %985 = vrot.lane.b32.xlu0 %v593, 64
      %v986 = vpop.permute.xlu0 %985
      %v987 = vrot.slane %v986, 4
      %v989 = vsel %vm639, %v984, 0
      %v992 = vsel %vm639, %v987, 0
      %994 = vmatpush.bf16.xpose.msra.mxu0 0
      %995 = vmatpush.bf16.xpose.msra.mxu0 0
      %996 = vmatpush.bf16.xpose.msra.mxu0 0
      %997 = vmatpush.bf16.xpose.msra.mxu0 0
      %998 = vmatpush.bf16.xpose.msra.mxu0 0
      %999 = vmatpush.bf16.xpose.msra.mxu0 0
      %1000 = vmatpush.bf16.xpose.msra.mxu0 0
      %1001 = vmatpush.bf16.xpose.msra.mxu0 %v992
      %1002 = vmatmul.bf16.gmra.mxu0 %v989
      %v1003 = vpop.f32.mrf.mxu0
      %v1004 = vadd.f32 0.0, %v1003
      %v1005 = vpop.f32.mrf.mxu0
      %1006 = vdwg.mxu0
      %v1007 = vsel %vm511, %v1004, -inf
      %1008 = vmax.xlane.f32.xlu0 %v1007
      %v1009 = vpop.xlane.xlu0 %1008
      %v1010 = vsub.f32 %v1004, %v1009
      %v1011 = vmul.f32 %v1010, 1.442695
      %v1012 = vpow.pop %v1011
      %v1013 = vsel %vm511, %v1012, 0.0
      %1014 = vadd.xlane.f32.xlu0 %v1013
      %v1015 = vpop.xlane.xlu0 %1014
      %v1016 = vrcp.pop %v1015
      %v1017 = vmul.f32 %v1012, %v1016
      %v1018 = vpack.c.bf16 %v1017, %v1017
      %1019 = vrot.lane.b32.xlu0 %v638, 64
      %v1020 = vpop.permute.xlu0 %1019
      %v1021 = vrot.slane %v1020, 4
      %v1023 = vsel %vm511, %v1018, 0
      %v1026 = vsel %vm515, %v1021, 0
      %1028 = vmatpush.bf16.msra.mxu0 0
      %1029 = vmatpush.bf16.msra.mxu0 0
      %1030 = vmatpush.bf16.msra.mxu0 0
      %1031 = vmatpush.bf16.msra.mxu0 0
      %1032 = vmatpush.bf16.msra.mxu0 0
      %1033 = vmatpush.bf16.msra.mxu0 0
      %1034 = vmatpush.bf16.msra.mxu0 0
      %1035 = vmatpush.bf16.msra.mxu0 %v1026
      %1036 = vmatmul.bf16.gmra.mxu0 %v1023
      %v1037 = vpop.f32.mrf.mxu0
      %v1038 = vadd.f32 0.0, %v1037
      %v1039 = vpop.f32.mrf.mxu0
      %1040 = vdwg.mxu0
      %v1041 = vadd.f32 %v979, %v1038
      %1042 = vrot.lane.b32.xlu0 %v548, 32
      %v1043 = vpop.permute.xlu0 %1042
      %v1044 = vrot.slane %v1043, 4
      %1045 = vrot.lane.b32.xlu0 %v593, 32
      %v1046 = vpop.permute.xlu0 %1045
      %v1047 = vrot.slane %v1046, 4
      %v1049 = vsel %vm639, %v1044, 0
      %v1052 = vsel %vm639, %v1047, 0
      %1054 = vmatpush.bf16.xpose.msra.mxu0 0
      %1055 = vmatpush.bf16.xpose.msra.mxu0 0
      %1056 = vmatpush.bf16.xpose.msra.mxu0 0
      %1057 = vmatpush.bf16.xpose.msra.mxu0 0
      %1058 = vmatpush.bf16.xpose.msra.mxu0 0
      %1059 = vmatpush.bf16.xpose.msra.mxu0 0
      %1060 = vmatpush.bf16.xpose.msra.mxu0 0
      %1061 = vmatpush.bf16.xpose.msra.mxu0 %v1052
      %1062 = vmatmul.bf16.gmra.mxu0 %v1049
      %v1063 = vpop.f32.mrf.mxu0
      %v1064 = vadd.f32 0.0, %v1063
      %v1065 = vpop.f32.mrf.mxu0
      %1066 = vdwg.mxu0
      %v1067 = vsel %vm511, %v1064, -inf
      %1068 = vmax.xlane.f32.xlu0 %v1067
      %v1069 = vpop.xlane.xlu0 %1068
      %v1070 = vsub.f32 %v1064, %v1069
      %v1071 = vmul.f32 %v1070, 1.442695
      %v1072 = vpow.pop %v1071
      %v1073 = vsel %vm511, %v1072, 0.0
      %1074 = vadd.xlane.f32.xlu0 %v1073
      %v1075 = vpop.xlane.xlu0 %1074
      %v1076 = vrcp.pop %v1075
      %v1077 = vmul.f32 %v1072, %v1076
      %v1078 = vpack.c.bf16 %v1077, %v1077
      %1079 = vrot.lane.b32.xlu0 %v638, 32
      %v1080 = vpop.permute.xlu0 %1079
      %v1081 = vrot.slane %v1080, 4
      %v1083 = vsel %vm511, %v1078, 0
      %v1086 = vsel %vm515, %v1081, 0
      %1088 = vmatpush.bf16.msra.mxu0 0
      %1089 = vmatpush.bf16.msra.mxu0 0
      %1090 = vmatpush.bf16.msra.mxu0 0
      %1091 = vmatpush.bf16.msra.mxu0 0
      %1092 = vmatpush.bf16.msra.mxu0 0
      %1093 = vmatpush.bf16.msra.mxu0 0
      %1094 = vmatpush.bf16.msra.mxu0 0
      %1095 = vmatpush.bf16.msra.mxu0 %v1086
      %1096 = vmatmul.bf16.gmra.mxu0 %v1083
      %v1097 = vpop.f32.mrf.mxu0
      %v1098 = vadd.f32 0.0, %v1097
      %v1099 = vpop.f32.mrf.mxu0
      %1100 = vdwg.mxu0
      %v1101 = vsub.f32 %v1041, %v1098
      %v1102 = vld [vmem:[%s10] sm:$0x1]
      %v1103 = vld [vmem:[%s11] sm:$0x1]
      %v1104 = vsel %vm639, %v869, 0.0
      %1105 = vadd.xlane.f32.xlu0 %v1104
      %v1106 = vpop.xlane.xlu0 %1105
      %v1107 = vrcp.pop 32.0
      %v1108 = vmul.f32 32.0, %v1107
      %v1109 = vsub.f32 1.0, %v1108
      %v1110 = vmul.f32 %v1107, %v1109
      %v1111 = vadd.f32 %v1107, %v1110
      %vm1112 = vweird.f32 %v1107
      %v1113 = vsel %vm1112, %v1107, %v1111
      %v1114 = vmul.f32 %v1106, %v1113
      %v1115 = vsub.f32 %v869, %v1114
      %v1116 = vmul.f32 %v1115, %v1115
      %v1117 = vsel %vm639, %v1116, 0.0
      %1118 = vadd.xlane.f32.xlu0 %v1117
      %v1119 = vpop.xlane.xlu0 %1118
      %v1120 = vmul.f32 %v1119, %v1113
      %v1121 = vadd.f32 %v1120, 1e-05
      %v1122 = vrsqrt.pop %v1121
      %v1123 = vmul.f32 %v1122, %v1121
      %v1124 = vmul.f32 %v1123, %v1122
      %v1125 = vmul.f32 0.5, %v1124
      %v1126 = vsub.f32 1.5, %v1125
      %v1127 = vmul.f32 %v1122, %v1126
      %vm1128 = vweird.f32 %v1121
      %vm1129 = vweird.f32 %v1122
      %vm1130 = vmor %vm1128, %vm1129
      %v1131 = vsel %vm1130, %v1122, %v1127
      %v1132 = vmul.f32 %v1115, %v1131
      %v1134 = vperm.slane %v1102, 0
      %v1136 = vmul.f32 %v1132, %v1134
      %v1138 = vperm.slane %v1103, 0
      %v1140 = vadd.f32 %v1136, %v1138
      %v1141 = vsel %vm639, %v1101, 0.0
      %1142 = vadd.xlane.f32.xlu0 %v1141
      %v1143 = vpop.xlane.xlu0 %1142
      %v1144 = vmul.f32 %v1143, %v1113
      %v1145 = vsub.f32 %v1101, %v1144
      %v1146 = vmul.f32 %v1145, %v1145
      %v1147 = vsel %vm639, %v1146, 0.0
      %1148 = vadd.xlane.f32.xlu0 %v1147
      %v1149 = vpop.xlane.xlu0 %1148
      %v1150 = vmul.f32 %v1149, %v1113
      %v1151 = vadd.f32 %v1150, 1e-05
      %v1152 = vrsqrt.pop %v1151
      %v1153 = vmul.f32 %v1152, %v1151
      %v1154 = vmul.f32 %v1153, %v1152
      %v1155 = vmul.f32 0.5, %v1154
      %v1156 = vsub.f32 1.5, %v1155
      %v1157 = vmul.f32 %v1152, %v1156
      %vm1158 = vweird.f32 %v1151
      %vm1159 = vweird.f32 %v1152
      %vm1160 = vmor %vm1158, %vm1159
      %v1161 = vsel %vm1160, %v1152, %v1157
      %v1162 = vmul.f32 %v1145, %v1161
      %v1163 = vmul.f32 %v1162, %v1134
      %v1164 = vadd.f32 %v1163, %v1138
      %1166 = vrot.lane.b32.xlu0 %v1164, 32
      %v1167 = vpop.permute.xlu0 %1166
      %v1169 = vsel %vm639, %v1140, %v1167
      %vm1170 = vcmask 523264
      %1171 = vst.msk [vmem:[%s425] sm:$0xff] %vm1170, %v1169
      %p1172 = scmp.lt.s32.totalorder %s23, 1
      %s1173 = scalar_select %p1172, %s23, 1
      %s1174 = smul.addr %s1173, 8
      %s1175 = scalar_lea.vmem %s12, %s1174
      // Predicated region
      $region69: #{self_attention_t_forward.1} parent=67 // pred_check
        %p1176 = pneg %p303
      $region70: #{self_attention_t_forward.1} parent=67 // pred_check_branch
        %1178 = sbr.rel (%p1176) target = $region72
      $region71: #{self_attention_t_forward.1} parent=67 // pred_region
        _
      $region72: #{self_attention_t_forward.1} parent=67 // pred_fallthru
        _
    $region68: #{self_attention_t_forward.1} parent=5 // pred_fallthru
      _
    %p1179 = scmp.le.s32.totalorder 2, %s18
    // Predicated region
    $region73: #{self_attention_t_forward.1} parent=5 // pred_check
      %p1180 = pneg %p1179
    $region74: #{self_attention_t_forward.1} parent=5 // pred_check_branch
      %1182 = sbr.rel (%p1180) target = $region76
    $region75: #{self_attention_t_forward.1} parent=5 // pred_region
      %s1183 = ssub.s32 %s18, 2
      // Predicated region
      $region77: #{self_attention_t_forward.1} parent=75 // pred_check
        %p1184 = pneg %p309
      $region78: #{self_attention_t_forward.1} parent=75 // pred_check_branch
        %1186 = sbr.rel (%p1184) target = $region80
      $region79: #{self_attention_t_forward.1} parent=75 // pred_region
        %p1187 = scmp.lt.s32.totalorder %s24, 1
        %s1188 = scalar_select %p1187, %s24, 1
        %s1189 = smul.addr %s1188, 8
        %s1190 = scalar_lea.vmem %s12, %s1189
      $region80: #{self_attention_t_forward.1} parent=75 // pred_fallthru
        _
    $region76: #{self_attention_t_forward.1} parent=5 // pred_fallthru
      _
  $region6: #{self_attention_t_forward.1} parent=0 // loop_footer
    %s22 = sadd.s32 1, %s18
  $region7: #{self_attention_t_forward.1} parent=0 // loop_footer_branch
    %17 = sbr.rel target = $region3
  $region8: #{self_attention_t_forward.1} parent=0 // loop_exit
    _

</llo_original>
